<compile_context>
chip_gen: v5e
topology: v5e:2x2
jax: 0.10.0
libtpu: 0.0.40
codegen_flags: <defaults>
</compile_context>

<pallas_src>
import functools
import math

import jax
import jax.numpy as jnp
from jax.experimental import pallas as pl
from jax.experimental.pallas import tpu as pltpu


# ----------------------------- Pallas kernel -------------------------------

def _layer_norm(x, gamma, beta, eps=1e-6):
    # Matches the module's LayerNormalization (eps=1e-6, biased variance).
    mean = jnp.mean(x, axis=-1, keepdims=True)
    var = jnp.mean((x - mean) ** 2, axis=-1, keepdims=True)
    return (x - mean) * jax.lax.rsqrt(var + eps) * gamma + beta


def encoder_stack_kernel(
    x_ref,        # (1, S, D)    input activations for this batch row
    wqkv_ref,     # (1, D, 3D)   fused q|k|v projection weight (y = x @ W)
    wo_ref,       # (1, D, D)    attention output projection
    w1_ref,       # (1, D, F)    FFN linear1
    w2_ref,       # (1, F, D)    FFN linear2
    bqkv_ref,     # (1, 1, 3D)   fused q|k|v bias
    bf1_ref,      # (1, 1, F)    FFN linear1 bias
    vd_ref,       # (1, 6, D)    rows: [bo, g1, be1, bf2, g2, be2]
    o_ref,        # (1, S, D)    output (written on the last layer only)
    h_ref,        # VMEM scratch (S, D) f32 — activation carried across layers
    *, nheads,
):
    layer = pl.program_id(1)
    n_layers = pl.num_programs(1)

    @pl.when(layer == 0)
    def _():
        h_ref[...] = x_ref[0].astype(jnp.float32)

    x = h_ref[...]                          # (S, D) f32, resident in VMEM
    S, D = x.shape
    hd = D // nheads
    scale = 1.0 / math.sqrt(hd)

    # ---- fused QKV projection: one MXU matmul with N = 3D lanes ----
    qkv = jnp.dot(x, wqkv_ref[0], preferred_element_type=jnp.float32) + bqkv_ref[0]
    qkvh = qkv.reshape(S, 3 * nheads, hd).transpose(1, 0, 2)   # (3H, S, hd)
    qh = qkvh[:nheads]                                          # (H, S, hd)
    kh = qkvh[nheads:2 * nheads]
    vh = qkvh[2 * nheads:]

    # ---- head-batched scaled-dot-product attention ----
    s = jnp.einsum("hqd,hkd->hqk", qh, kh,
                   preferred_element_type=jnp.float32) * scale   # (H, S, S)
    s = s - jnp.max(s, axis=-1, keepdims=True)
    p = jnp.exp(s)
    denom = jnp.sum(p, axis=-1, keepdims=True)
    inv = pl.reciprocal(denom, approx=True)
    inv = inv * (2.0 - denom * inv)          # one Newton step -> ~f32 accuracy
    p = p * inv
    ctx = jnp.einsum("hqk,hkd->hqd", p, vh,
                     preferred_element_type=jnp.float32)          # (H, S, hd)
    attn = ctx.transpose(1, 0, 2).reshape(S, D)                   # (S, D)

    vd = vd_ref[0]                           # (6, D)
    bo, g1, be1, bf2, g2, be2 = (vd[i:i + 1, :] for i in range(6))

    # ---- output projection + residual + LayerNorm 1 ----
    attn = jnp.dot(attn, wo_ref[0], preferred_element_type=jnp.float32) + bo
    h1 = _layer_norm(x + attn, g1, be1)

    # ---- feed-forward + residual + LayerNorm 2 ----
    ff = jnp.dot(h1, w1_ref[0], preferred_element_type=jnp.float32) + bf1_ref[0]
    ff = jnp.maximum(ff, 0.0)                # ReLU
    ff = jnp.dot(ff, w2_ref[0], preferred_element_type=jnp.float32) + bf2
    h2 = _layer_norm(h1 + ff, g2, be2)

    h_ref[...] = h2                          # carry to next layer (stays in VMEM)

    @pl.when(layer == n_layers - 1)
    def _():
        o_ref[0] = h2.astype(o_ref.dtype)


# ------------------------------ JAX wrapper ---------------------------------

def encoder(x, params, nheads):
    B, S, D = x.shape
    L, _, F = params["w1"].shape

    kernel = functools.partial(encoder_stack_kernel, nheads=nheads)

    return pl.pallas_call(
        kernel,
        out_shape=jax.ShapeDtypeStruct((B, S, D), x.dtype),
        grid_spec=pltpu.PrefetchScalarGridSpec(
            num_scalar_prefetch=0,
            grid=(B, L),                       # batch parallel, layers arbitrary
            in_specs=[
                pl.BlockSpec((1, S, D), lambda b, l: (b, 0, 0)),      # x
                pl.BlockSpec((1, D, 3 * D), lambda b, l: (l, 0, 0)),  # wqkv
                pl.BlockSpec((1, D, D), lambda b, l: (l, 0, 0)),      # wo
                pl.BlockSpec((1, D, F), lambda b, l: (l, 0, 0)),      # w1
                pl.BlockSpec((1, F, D), lambda b, l: (l, 0, 0)),      # w2
                pl.BlockSpec((1, 1, 3 * D), lambda b, l: (l, 0, 0)),  # bqkv
                pl.BlockSpec((1, 1, F), lambda b, l: (l, 0, 0)),      # bf1
                pl.BlockSpec((1, 6, D), lambda b, l: (l, 0, 0)),      # vd pack
            ],
            out_specs=pl.BlockSpec((1, S, D), lambda b, l: (b, 0, 0)),
            scratch_shapes=[pltpu.VMEM((S, D), jnp.float32)],
        ),
        compiler_params=pltpu.CompilerParams(
            dimension_semantics=("parallel", "arbitrary")),
    )(x, params["wqkv"], params["wo"], params["w1"], params["w2"],
      params["bqkv"], params["bf1"], params["vd"])


# -------------------------- deterministic params ----------------------------

def init_params(key, num_layers, d_model, dim_feedforward):
    D, F = d_model, dim_feedforward
    packs = {"wqkv": [], "wo": [], "w1": [], "w2": [],
             "bqkv": [], "bf1": [], "vd": []}
    for lkey in jax.random.split(key, num_layers):
        ks = jax.random.split(lkey, 12)
        # PyTorch-convention weights, then pre-transposed so kernel does x @ W.
        in_proj_w = 0.1 * jax.random.normal(ks[0], (3 * D, D), jnp.float32)
        in_proj_b = 0.1 * jax.random.normal(ks[1], (3 * D,), jnp.float32)
        out_w = 0.1 * jax.random.normal(ks[2], (D, D), jnp.float32)
        out_b = 0.1 * jax.random.normal(ks[3], (D,), jnp.float32)
        w1 = 0.1 * jax.random.normal(ks[4], (F, D), jnp.float32)
        b1 = 0.1 * jax.random.normal(ks[5], (F,), jnp.float32)
        w2 = 0.1 * jax.random.normal(ks[6], (D, F), jnp.float32)
        b2 = 0.1 * jax.random.normal(ks[7], (D,), jnp.float32)
        g1 = 1.0 + 0.05 * jax.random.normal(ks[8], (D,), jnp.float32)
        be1 = 0.05 * jax.random.normal(ks[9], (D,), jnp.float32)
        g2 = 1.0 + 0.05 * jax.random.normal(ks[10], (D,), jnp.float32)
        be2 = 0.05 * jax.random.normal(ks[11], (D,), jnp.float32)

        packs["wqkv"].append(in_proj_w.T)                 # (D, 3D) -> x@W = [q|k|v]
        packs["bqkv"].append(in_proj_b.reshape(1, 3 * D))
        packs["wo"].append(out_w.T)                       # (D, D)
        packs["w1"].append(w1.T)                          # (D, F)
        packs["bf1"].append(b1.reshape(1, F))
        packs["w2"].append(w2.T)                          # (F, D)
        packs["vd"].append(jnp.stack([out_b, g1, be1, b2, g2, be2], axis=0))
    return {k: jnp.stack(v, axis=0) for k, v in packs.items()}


# ------------------------------ pure-JAX ref ---------------------------------

def encoder_ref(x, params, nheads):
    B, S, D = x.shape
    L = params["wqkv"].shape[0]
    hd = D // nheads

    def ln(y, g, b, eps=1e-6):
        m = jnp.mean(y, -1, keepdims=True)
        v = jnp.mean((y - m) ** 2, -1, keepdims=True)
        return (y - m) / jnp.sqrt(v + eps) * g + b

    for l in range(L):
        wqkv = params["wqkv"][l]; bqkv = params["bqkv"][l, 0]
        wo = params["wo"][l]; w1 = params["w1"][l]; w2 = params["w2"][l]
        bf1 = params["bf1"][l, 0]
        bo, g1, be1, bf2, g2, be2 = (params["vd"][l, i] for i in range(6))

        qkv = x @ wqkv + bqkv
        q, k, v = qkv[..., :D], qkv[..., D:2 * D], qkv[..., 2 * D:]
        qh = q.reshape(B, S, nheads, hd).transpose(0, 2, 1, 3)
        kh = k.reshape(B, S, nheads, hd).transpose(0, 2, 1, 3)
        vh = v.reshape(B, S, nheads, hd).transpose(0, 2, 1, 3)
        s = (qh @ kh.transpose(0, 1, 3, 2)) / math.sqrt(hd)
        a = jax.nn.softmax(s, axis=-1)
        o = (a @ vh).transpose(0, 2, 1, 3).reshape(B, S, D)
        attn = o @ wo + bo
        h1 = ln(x + attn, g1, be1)
        ff = jnp.maximum(h1 @ w1 + bf1, 0.0) @ w2 + bf2
        x = ln(h1 + ff, g2, be2)
    return x


# ---------------------------------- main -------------------------------------

if __name__ == "__main__":
    num_layers = 2
    d_model = 32
    nheads = 4
    dim_feedforward = 64
    B, S = 2, 8

    key = jax.random.PRNGKey(0)
    kx, kp = jax.random.split(key)

    x = jax.random.normal(kx, (B, S, d_model), jnp.float32)
    params = init_params(kp, num_layers, d_model, dim_feedforward)

    out = encoder(x, params, nheads)
    out = jax.block_until_ready(out)

    with jax.default_matmul_precision("float32"):
        ref = encoder_ref(x, params, nheads)

    assert out.shape == (B, S, d_model)
    assert jnp.allclose(out, ref, atol=1e-3, rtol=1e-3), "mismatch vs JAX reference"

    print("KERNEL_OK")
</pallas_src>

<mosaic_0001>
module attributes {stable_mosaic.version = 11 : i64} {
  func.func @encoder_stack_kernel(%arg0: i32, %arg1: i32, %arg2: memref<1x8x32xf32, #tpu.memory_space<vmem>>, %arg3: memref<1x32x96xf32, #tpu.memory_space<vmem>>, %arg4: memref<1x32x32xf32, #tpu.memory_space<vmem>>, %arg5: memref<1x32x64xf32, #tpu.memory_space<vmem>>, %arg6: memref<1x64x32xf32, #tpu.memory_space<vmem>>, %arg7: memref<1x1x96xf32, #tpu.memory_space<vmem>>, %arg8: memref<1x1x64xf32, #tpu.memory_space<vmem>>, %arg9: memref<1x6x32xf32, #tpu.memory_space<vmem>>, %arg10: memref<1x8x32xf32, #tpu.memory_space<vmem>>, %arg11: memref<8x32xf32, #tpu.memory_space<vmem>>) attributes {dimension_semantics = [#tpu.dimension_semantics<parallel>, #tpu.dimension_semantics<arbitrary>], iteration_bounds = array<i64: 2, 2>, scalar_prefetch = 0 : i64, scratch_operands = 1 : i64, tpu.core_type = #tpu.core_type<tc>, window_params = [{transform_indices = @transform_0, window_bounds = array<i64: 1, 8, 32>}, {transform_indices = @transform_1, window_bounds = array<i64: 1, 32, 96>}, {transform_indices = @transform_2, window_bounds = array<i64: 1, 32, 32>}, {transform_indices = @transform_3, window_bounds = array<i64: 1, 32, 64>}, {transform_indices = @transform_4, window_bounds = array<i64: 1, 64, 32>}, {transform_indices = @transform_5, window_bounds = array<i64: 1, 1, 96>}, {transform_indices = @transform_6, window_bounds = array<i64: 1, 1, 64>}, {transform_indices = @transform_7, window_bounds = array<i64: 1, 6, 32>}, {transform_indices = @transform_8, window_bounds = array<i64: 1, 8, 32>}]} {
    %c0_i32 = arith.constant 0 : i32
    %0 = arith.cmpi eq, %arg1, %c0_i32 : i32
    %1 = arith.extui %0 : i1 to i32
    %c0_i32_0 = arith.constant 0 : i32
    %2 = arith.cmpi ne, %1, %c0_i32_0 : i32
    scf.if %2 {
      %c0_46 = arith.constant 0 : index
      %c0_47 = arith.constant 0 : index
      %c0_48 = arith.constant 0 : index
      %113 = vector.load %arg2[%c0_46, %c0_47, %c0_48] : memref<1x8x32xf32, #tpu.memory_space<vmem>>, vector<1x8x32xf32>
      %114 = vector.shape_cast %113 : vector<1x8x32xf32> to vector<8x32xf32>
      %c0_49 = arith.constant 0 : index
      %c0_50 = arith.constant 0 : index
      %115 = vector.load %arg11[%c0_49, %c0_50] : memref<8x32xf32, #tpu.memory_space<vmem>>, vector<8x32xf32>
      tpu.vector_store %arg11[%c0_49, %c0_50], %114 {strides = array<i32>} : memref<8x32xf32, #tpu.memory_space<vmem>>, vector<8x32xf32>,
    } else {
    }
    %c0 = arith.constant 0 : index
    %c0_1 = arith.constant 0 : index
    %3 = vector.load %arg11[%c0, %c0_1] : memref<8x32xf32, #tpu.memory_space<vmem>>, vector<8x32xf32>
    %c0_2 = arith.constant 0 : index
    %c0_3 = arith.constant 0 : index
    %c0_4 = arith.constant 0 : index
    %4 = vector.load %arg3[%c0_2, %c0_3, %c0_4] : memref<1x32x96xf32, #tpu.memory_space<vmem>>, vector<1x32x96xf32>
    %5 = vector.shape_cast %4 : vector<1x32x96xf32> to vector<32x96xf32>
    %cst = arith.constant dense<0.000000e+00> : vector<8x96xf32>
    %6 = tpu.matmul %3, %5, %cst {dimension_numbers = #tpu.dot_dimension_numbers<[1], [0], [0], [1], [0, 0, 1, 1], [], []>} : vector<8x32xf32>, vector<32x96xf32>, vector<8x96xf32> -> vector<8x96xf32>
    %c0_5 = arith.constant 0 : index
    %c0_6 = arith.constant 0 : index
    %c0_7 = arith.constant 0 : index
    %7 = vector.load %arg7[%c0_5, %c0_6, %c0_7] : memref<1x1x96xf32, #tpu.memory_space<vmem>>, vector<1x1x96xf32>
    %8 = vector.shape_cast %7 : vector<1x1x96xf32> to vector<1x96xf32>
    %9 = vector.broadcast %8 : vector<1x96xf32> to vector<8x96xf32>
    %10 = arith.addf %6, %9 : vector<8x96xf32>
    %11 = vector.shape_cast %10 : vector<8x96xf32> to vector<8x12x8xf32>
    %12 = tpu.transpose %11, [1, 0, 2] : vector<8x12x8xf32> -> vector<12x8x8xf32>
    %13 = vector.extract_strided_slice %12 {offsets = [0, 0, 0], sizes = [4, 8, 8], strides = [1, 1, 1]} : vector<12x8x8xf32> to vector<4x8x8xf32>
    %14 = vector.extract_strided_slice %12 {offsets = [4, 0, 0], sizes = [4, 8, 8], strides = [1, 1, 1]} : vector<12x8x8xf32> to vector<4x8x8xf32>
    %15 = vector.extract_strided_slice %12 {offsets = [8, 0, 0], sizes = [4, 8, 8], strides = [1, 1, 1]} : vector<12x8x8xf32> to vector<4x8x8xf32>
    "tpu.trace_start"() <{level = 10 : i32, message = "hqd,hkd->hqk"}> : () -> ()
    %cst_8 = arith.constant dense<0.000000e+00> : vector<4x8x8xf32>
    %16 = tpu.matmul %13, %14, %cst_8 {dimension_numbers = #tpu.dot_dimension_numbers<[2], [2], [1], [1], [0, 0, 0, 1, 1, 1], [0], [0]>} : vector<4x8x8xf32>, vector<4x8x8xf32>, vector<4x8x8xf32> -> vector<4x8x8xf32>
    "tpu.trace_stop"() : () -> ()
    %cst_9 = arith.constant 0.353553385 : f32
    %17 = vector.broadcast %cst_9 : f32 to vector<4x8x8xf32>
    %18 = arith.mulf %16, %17 : vector<4x8x8xf32>
    %cst_10 = arith.constant dense<0xFF800000> : vector<4x8xf32>
    %19 = vector.multi_reduction <maximumf>, %18, %cst_10 [2] : vector<4x8x8xf32> to vector<4x8xf32>
    %20 = vector.shape_cast %19 : vector<4x8xf32> to vector<4x8x1xf32>
    %21 = vector.broadcast %20 : vector<4x8x1xf32> to vector<4x8x8xf32>
    %22 = arith.subf %18, %21 : vector<4x8x8xf32>
    %23 = math.exp %22 : vector<4x8x8xf32>
    %cst_11 = arith.constant dense<0.000000e+00> : vector<4x8xf32>
    %24 = vector.multi_reduction <add>, %23, %cst_11 [2] : vector<4x8x8xf32> to vector<4x8xf32>
    %25 = vector.shape_cast %24 : vector<4x8xf32> to vector<4x8x1xf32>
    %26 = tpu.reciprocal %25 {approx = true} : vector<4x8x1xf32> -> vector<4x8x1xf32>
    %27 = arith.mulf %25, %26 : vector<4x8x1xf32>
    %cst_12 = arith.constant 2.000000e+00 : f32
    %28 = vector.broadcast %cst_12 : f32 to vector<4x8x1xf32>
    %29 = arith.subf %28, %27 : vector<4x8x1xf32>
    %30 = arith.mulf %26, %29 : vector<4x8x1xf32>
    %31 = vector.broadcast %30 : vector<4x8x1xf32> to vector<4x8x8xf32>
    %32 = arith.mulf %23, %31 : vector<4x8x8xf32>
    "tpu.trace_start"() <{level = 10 : i32, message = "hqk,hkd->hqd"}> : () -> ()
    %cst_13 = arith.constant dense<0.000000e+00> : vector<4x8x8xf32>
    %33 = tpu.matmul %32, %15, %cst_13 {dimension_numbers = #tpu.dot_dimension_numbers<[2], [1], [1], [2], [0, 0, 0, 1, 1, 2], [0], [0]>} : vector<4x8x8xf32>, vector<4x8x8xf32>, vector<4x8x8xf32> -> vector<4x8x8xf32>
    "tpu.trace_stop"() : () -> ()
    %34 = tpu.transpose %33, [1, 0, 2] : vector<4x8x8xf32> -> vector<8x4x8xf32>
    %35 = vector.shape_cast %34 : vector<8x4x8xf32> to vector<8x32xf32>
    %c0_14 = arith.constant 0 : index
    %c0_15 = arith.constant 0 : index
    %c0_16 = arith.constant 0 : index
    %36 = vector.load %arg9[%c0_14, %c0_15, %c0_16] : memref<1x6x32xf32, #tpu.memory_space<vmem>>, vector<1x6x32xf32>
    %37 = vector.shape_cast %36 : vector<1x6x32xf32> to vector<6x32xf32>
    %38 = vector.extract_strided_slice %37 {offsets = [0, 0], sizes = [1, 32], strides = [1, 1]} : vector<6x32xf32> to vector<1x32xf32>
    %39 = vector.extract_strided_slice %37 {offsets = [1, 0], sizes = [1, 32], strides = [1, 1]} : vector<6x32xf32> to vector<1x32xf32>
    %40 = vector.extract_strided_slice %37 {offsets = [2, 0], sizes = [1, 32], strides = [1, 1]} : vector<6x32xf32> to vector<1x32xf32>
    %41 = vector.extract_strided_slice %37 {offsets = [3, 0], sizes = [1, 32], strides = [1, 1]} : vector<6x32xf32> to vector<1x32xf32>
    %42 = vector.extract_strided_slice %37 {offsets = [4, 0], sizes = [1, 32], strides = [1, 1]} : vector<6x32xf32> to vector<1x32xf32>
    %43 = vector.extract_strided_slice %37 {offsets = [5, 0], sizes = [1, 32], strides = [1, 1]} : vector<6x32xf32> to vector<1x32xf32>
    %c0_17 = arith.constant 0 : index
    %c0_18 = arith.constant 0 : index
    %c0_19 = arith.constant 0 : index
    %44 = vector.load %arg4[%c0_17, %c0_18, %c0_19] : memref<1x32x32xf32, #tpu.memory_space<vmem>>, vector<1x32x32xf32>
    %45 = vector.shape_cast %44 : vector<1x32x32xf32> to vector<32x32xf32>
    %cst_20 = arith.constant dense<0.000000e+00> : vector<8x32xf32>
    %46 = tpu.matmul %35, %45, %cst_20 {dimension_numbers = #tpu.dot_dimension_numbers<[1], [0], [0], [1], [0, 0, 1, 1], [], []>} : vector<8x32xf32>, vector<32x32xf32>, vector<8x32xf32> -> vector<8x32xf32>
    %47 = vector.broadcast %38 : vector<1x32xf32> to vector<8x32xf32>
    %48 = arith.addf %46, %47 : vector<8x32xf32>
    %49 = arith.addf %3, %48 : vector<8x32xf32>
    %cst_21 = arith.constant dense<0.000000e+00> : vector<8xf32>
    %50 = vector.multi_reduction <add>, %49, %cst_21 [1] : vector<8x32xf32> to vector<8xf32>
    %51 = vector.shape_cast %50 : vector<8xf32> to vector<8x1xf32>
    %cst_22 = arith.constant 3.200000e+01 : f32
    %52 = vector.broadcast %cst_22 : f32 to vector<8x1xf32>
    %53 = arith.divf %51, %52 : vector<8x1xf32>
    %54 = vector.broadcast %53 : vector<8x1xf32> to vector<8x32xf32>
    %55 = arith.subf %49, %54 : vector<8x32xf32>
    %56 = arith.mulf %55, %55 : vector<8x32xf32>
    %cst_23 = arith.constant dense<0.000000e+00> : vector<8xf32>
    %57 = vector.multi_reduction <add>, %56, %cst_23 [1] : vector<8x32xf32> to vector<8xf32>
    %58 = vector.shape_cast %57 : vector<8xf32> to vector<8x1xf32>
    %cst_24 = arith.constant 3.200000e+01 : f32
    %59 = vector.broadcast %cst_24 : f32 to vector<8x1xf32>
    %60 = arith.divf %58, %59 : vector<8x1xf32>
    %61 = vector.broadcast %53 : vector<8x1xf32> to vector<8x32xf32>
    %62 = arith.subf %49, %61 : vector<8x32xf32>
    %cst_25 = arith.constant 9.99999997E-7 : f32
    %63 = vector.broadcast %cst_25 : f32 to vector<8x1xf32>
    %64 = arith.addf %60, %63 : vector<8x1xf32>
    %65 = math.rsqrt %64 : vector<8x1xf32>
    %66 = vector.broadcast %65 : vector<8x1xf32> to vector<8x32xf32>
    %67 = arith.mulf %62, %66 : vector<8x32xf32>
    %68 = vector.broadcast %39 : vector<1x32xf32> to vector<8x32xf32>
    %69 = arith.mulf %67, %68 : vector<8x32xf32>
    %70 = vector.broadcast %40 : vector<1x32xf32> to vector<8x32xf32>
    %71 = arith.addf %69, %70 : vector<8x32xf32>
    %c0_26 = arith.constant 0 : index
    %c0_27 = arith.constant 0 : index
    %c0_28 = arith.constant 0 : index
    %72 = vector.load %arg5[%c0_26, %c0_27, %c0_28] : memref<1x32x64xf32, #tpu.memory_space<vmem>>, vector<1x32x64xf32>
    %73 = vector.shape_cast %72 : vector<1x32x64xf32> to vector<32x64xf32>
    %cst_29 = arith.constant dense<0.000000e+00> : vector<8x64xf32>
    %74 = tpu.matmul %71, %73, %cst_29 {dimension_numbers = #tpu.dot_dimension_numbers<[1], [0], [0], [1], [0, 0, 1, 1], [], []>} : vector<8x32xf32>, vector<32x64xf32>, vector<8x64xf32> -> vector<8x64xf32>
    %c0_30 = arith.constant 0 : index
    %c0_31 = arith.constant 0 : index
    %c0_32 = arith.constant 0 : index
    %75 = vector.load %arg8[%c0_30, %c0_31, %c0_32] : memref<1x1x64xf32, #tpu.memory_space<vmem>>, vector<1x1x64xf32>
    %76 = vector.shape_cast %75 : vector<1x1x64xf32> to vector<1x64xf32>
    %77 = vector.broadcast %76 : vector<1x64xf32> to vector<8x64xf32>
    %78 = arith.addf %74, %77 : vector<8x64xf32>
    %cst_33 = arith.constant 0.000000e+00 : f32
    %79 = vector.broadcast %cst_33 : f32 to vector<8x64xf32>
    %80 = arith.maximumf %78, %79 : vector<8x64xf32>
    %c0_34 = arith.constant 0 : index
    %c0_35 = arith.constant 0 : index
    %c0_36 = arith.constant 0 : index
    %81 = vector.load %arg6[%c0_34, %c0_35, %c0_36] : memref<1x64x32xf32, #tpu.memory_space<vmem>>, vector<1x64x32xf32>
    %82 = vector.shape_cast %81 : vector<1x64x32xf32> to vector<64x32xf32>
    %cst_37 = arith.constant dense<0.000000e+00> : vector<8x32xf32>
    %83 = tpu.matmul %80, %82, %cst_37 {dimension_numbers = #tpu.dot_dimension_numbers<[1], [0], [0], [1], [0, 0, 1, 1], [], []>} : vector<8x64xf32>, vector<64x32xf32>, vector<8x32xf32> -> vector<8x32xf32>
    %84 = vector.broadcast %41 : vector<1x32xf32> to vector<8x32xf32>
    %85 = arith.addf %83, %84 : vector<8x32xf32>
    %86 = arith.addf %71, %85 : vector<8x32xf32>
    %cst_38 = arith.constant dense<0.000000e+00> : vector<8xf32>
    %87 = vector.multi_reduction <add>, %86, %cst_38 [1] : vector<8x32xf32> to vector<8xf32>
    %88 = vector.shape_cast %87 : vector<8xf32> to vector<8x1xf32>
    %cst_39 = arith.constant 3.200000e+01 : f32
    %89 = vector.broadcast %cst_39 : f32 to vector<8x1xf32>
    %90 = arith.divf %88, %89 : vector<8x1xf32>
    %91 = vector.broadcast %90 : vector<8x1xf32> to vector<8x32xf32>
    %92 = arith.subf %86, %91 : vector<8x32xf32>
    %93 = arith.mulf %92, %92 : vector<8x32xf32>
    %cst_40 = arith.constant dense<0.000000e+00> : vector<8xf32>
    %94 = vector.multi_reduction <add>, %93, %cst_40 [1] : vector<8x32xf32> to vector<8xf32>
    %95 = vector.shape_cast %94 : vector<8xf32> to vector<8x1xf32>
    %cst_41 = arith.constant 3.200000e+01 : f32
    %96 = vector.broadcast %cst_41 : f32 to vector<8x1xf32>
    %97 = arith.divf %95, %96 : vector<8x1xf32>
    %98 = vector.broadcast %90 : vector<8x1xf32> to vector<8x32xf32>
    %99 = arith.subf %86, %98 : vector<8x32xf32>
    %cst_42 = arith.constant 9.99999997E-7 : f32
    %100 = vector.broadcast %cst_42 : f32 to vector<8x1xf32>
    %101 = arith.addf %97, %100 : vector<8x1xf32>
    %102 = math.rsqrt %101 : vector<8x1xf32>
    %103 = vector.broadcast %102 : vector<8x1xf32> to vector<8x32xf32>
    %104 = arith.mulf %99, %103 : vector<8x32xf32>
    %105 = vector.broadcast %42 : vector<1x32xf32> to vector<8x32xf32>
    %106 = arith.mulf %104, %105 : vector<8x32xf32>
    %107 = vector.broadcast %43 : vector<1x32xf32> to vector<8x32xf32>
    %108 = arith.addf %106, %107 : vector<8x32xf32>
    %c0_43 = arith.constant 0 : index
    %c0_44 = arith.constant 0 : index
    %109 = vector.load %arg11[%c0_43, %c0_44] : memref<8x32xf32, #tpu.memory_space<vmem>>, vector<8x32xf32>
    tpu.vector_store %arg11[%c0_43, %c0_44], %108 {strides = array<i32>} : memref<8x32xf32, #tpu.memory_space<vmem>>, vector<8x32xf32>,
    %c1_i32 = arith.constant 1 : i32
    %110 = arith.cmpi eq, %arg1, %c1_i32 : i32
    %111 = arith.extui %110 : i1 to i32
    %c0_i32_45 = arith.constant 0 : i32
    %112 = arith.cmpi ne, %111, %c0_i32_45 : i32
    scf.if %112 {
      %c0_46 = arith.constant 0 : index
      %c0_47 = arith.constant 0 : index
      %c0_48 = arith.constant 0 : index
      %113 = vector.load %arg10[%c0_46, %c0_47, %c0_48] : memref<1x8x32xf32, #tpu.memory_space<vmem>>, vector<1x8x32xf32>
      %114 = vector.shape_cast %113 : vector<1x8x32xf32> to vector<8x32xf32>
      %115 = vector.shape_cast %108 : vector<8x32xf32> to vector<1x8x32xf32>
      tpu.vector_store %arg10[%c0_46, %c0_47, %c0_48], %115 {strides = array<i32>} : memref<1x8x32xf32, #tpu.memory_space<vmem>>, vector<1x8x32xf32>,
    } else {
    }
    return
  }
  func.func @transform_0(%arg0: i32, %arg1: i32) -> (i32, i32, i32) {
    %c0_i32 = arith.constant 0 : i32
    %c0_i32_0 = arith.constant 0 : i32
    %c0_i32_1 = arith.constant 0 : i32
    return %arg0, %c0_i32, %c0_i32_0 : i32, i32, i32
  }
  func.func @transform_1(%arg0: i32, %arg1: i32) -> (i32, i32, i32) {
    %c0_i32 = arith.constant 0 : i32
    %c0_i32_0 = arith.constant 0 : i32
    %c0_i32_1 = arith.constant 0 : i32
    return %arg1, %c0_i32, %c0_i32_0 : i32, i32, i32
  }
  func.func @transform_2(%arg0: i32, %arg1: i32) -> (i32, i32, i32) {
    %c0_i32 = arith.constant 0 : i32
    %c0_i32_0 = arith.constant 0 : i32
    %c0_i32_1 = arith.constant 0 : i32
    return %arg1, %c0_i32, %c0_i32_0 : i32, i32, i32
  }
  func.func @transform_3(%arg0: i32, %arg1: i32) -> (i32, i32, i32) {
    %c0_i32 = arith.constant 0 : i32
    %c0_i32_0 = arith.constant 0 : i32
    %c0_i32_1 = arith.constant 0 : i32
    return %arg1, %c0_i32, %c0_i32_0 : i32, i32, i32
  }
  func.func @transform_4(%arg0: i32, %arg1: i32) -> (i32, i32, i32) {
    %c0_i32 = arith.constant 0 : i32
    %c0_i32_0 = arith.constant 0 : i32
    %c0_i32_1 = arith.constant 0 : i32
    return %arg1, %c0_i32, %c0_i32_0 : i32, i32, i32
  }
  func.func @transform_5(%arg0: i32, %arg1: i32) -> (i32, i32, i32) {
    %c0_i32 = arith.constant 0 : i32
    %c0_i32_0 = arith.constant 0 : i32
    %c0_i32_1 = arith.constant 0 : i32
    return %arg1, %c0_i32, %c0_i32_0 : i32, i32, i32
  }
  func.func @transform_6(%arg0: i32, %arg1: i32) -> (i32, i32, i32) {
    %c0_i32 = arith.constant 0 : i32
    %c0_i32_0 = arith.constant 0 : i32
    %c0_i32_1 = arith.constant 0 : i32
    return %arg1, %c0_i32, %c0_i32_0 : i32, i32, i32
  }
  func.func @transform_7(%arg0: i32, %arg1: i32) -> (i32, i32, i32) {
    %c0_i32 = arith.constant 0 : i32
    %c0_i32_0 = arith.constant 0 : i32
    %c0_i32_1 = arith.constant 0 : i32
    return %arg1, %c0_i32, %c0_i32_0 : i32, i32, i32
  }
  func.func @transform_8(%arg0: i32, %arg1: i32) -> (i32, i32, i32) {
    %c0_i32 = arith.constant 0 : i32
    %c0_i32_0 = arith.constant 0 : i32
    %c0_i32_1 = arith.constant 0 : i32
    return %arg0, %c0_i32, %c0_i32_0 : i32, i32, i32
  }
}

</mosaic_0001>

<llo_original>
// kernel: tpu_custom_call.1
$region0: #{tpu_custom_call.1}
  #allocation0 [shape = 'u32[]', space=smem, size = 0x4, offset = 0x4, fixed_abs, tag = 'smem constant byte address 0x4 - core index']
  #allocation1 [shape = 'u32[72,128]{1,0:T(1,128)}', space=vmem, size = 0x9000, scoped, tag = 'internal scratch']
  #allocation2 [shape = 'f32[8,32]{1,0:T(8,128)}', space=vmem, size = 0x1000, scoped, tag = 'scratch operand']
  %s0 = inlined_call_operand.vmem [shape: f32[2,8,32], index: 0, kind: input, shape index: {}]
  %s1 = inlined_call_operand.vmem [shape: f32[2,32,96], index: 1, kind: input, shape index: {}]
  %s2 = inlined_call_operand.vmem [shape: f32[2,32,32], index: 2, kind: input, shape index: {}]
  %s3 = inlined_call_operand.vmem [shape: f32[2,32,64], index: 3, kind: input, shape index: {}]
  %s4 = inlined_call_operand.vmem [shape: f32[2,64,32], index: 4, kind: input, shape index: {}]
  %s5 = inlined_call_operand.vmem [shape: f32[2,1,96], index: 5, kind: input, shape index: {}]
  %s6 = inlined_call_operand.vmem [shape: f32[2,1,64], index: 6, kind: input, shape index: {}]
  %s7 = inlined_call_operand.vmem [shape: f32[2,6,32], index: 7, kind: input, shape index: {}]
  %s8 = inlined_call_operand.hbm [shape: f32[2,8,32], index: 8, kind: output, shape index: {}]
  %s9 = sld [smem:[#allocation0]]
  $region73: #{tpu_custom_call.1} parent=0
    _
  %s11 = ssub.s32 1, %s9
  %s12 = scalar_select 0, %s11, %s9
  $region1: #{tpu_custom_call.1} parent=0
    #allocation3 [shape = 'u8[8192]{0}', space=vmem, size = 0x2000, scoped, tag = 'output window, operand 0']
    #allocation4 [shape = 's32[2]{0}', space=sflag, size = 0x8, scoped, tag = 'scoped memory for tpu_custom_call.1']
    %13 = vsyncpa [#allocation4], 0
    %s14 = scalar_lea.sflag [#allocation4], 1
    %15 = vsyncpa %s14, 0
    loop: start=0, step=1, limit=6
    $region2: #{tpu_custom_call.1} parent=1 // loop_pre_header
      _
    $region3: #{tpu_custom_call.1} parent=1 // loop_header
      %s17 = sphi 0, %s21
      %p18 = scmp.ge.s32.totalorder %s17, 6
      %s24 = sphi 0, %s36
      %s25 = sphi 0, %s32
      %s26 = sphi 0, %s24
      %s27 = sphi 0, %s25
      %s28 = sphi 0, %s26
      %s29 = sphi 0, %s27
      %s39 = sphi 0, %s41
      %s42 = sphi 0, %s39
      %s43 = sphi 0, %s42
      %s59 = sphi 0, %s43
      %s65 = sphi 0, %s67
      %s68 = sphi 0, %s65
      %s69 = sphi 0, %s68
      %s85 = sphi 0, %s69
      %s91 = sphi 0, %s93
      %s94 = sphi 0, %s91
      %s95 = sphi 0, %s94
      %s111 = sphi 0, %s95
      %s117 = sphi 0, %s119
      %s120 = sphi 0, %s117
      %s121 = sphi 0, %s120
      %s137 = sphi 0, %s121
      %s143 = sphi 0, %s145
      %s146 = sphi 0, %s143
      %s147 = sphi 0, %s146
      %s163 = sphi 0, %s147
      %s169 = sphi 0, %s171
      %s172 = sphi 0, %s169
      %s173 = sphi 0, %s172
      %s189 = sphi 0, %s173
      %s195 = sphi 0, %s197
      %s198 = sphi 0, %s195
      %s199 = sphi 0, %s198
      %s215 = sphi 0, %s199
      %s221 = sphi 0, %s223
      %s224 = sphi 0, %s221
      %s225 = sphi 0, %s224
      %s241 = sphi 0, %s225
      %s247 = sphi 0, %s249
      %s250 = sphi 0, %s247
      %s251 = sphi 0, %s250
      %s267 = sphi 0, %s251
    $region4: #{tpu_custom_call.1} parent=1 // loop_header_branch
      %20 = sbr.rel (%p18) target = $region8
    $region5: #{tpu_custom_call.1} parent=1 // loop_body
      %s22 = ssub.s32 %s17, 1
      %s23 = ssub.s32 %s17, 2
      %s30 = sadd.s32 1, %s25
      %p31 = scmp.ge.s32.totalorder %s30, 2
      %s32 = scalar_select %p31, 0, %s30
      %s33 = sadd.s32 1, %s24
      %s34 = scalar_select %p31, %s33, %s24
      %p35 = scmp.ge.s32.totalorder %s34, 2
      %s36 = scalar_select %p35, 0, %s34
      %s37 = ssub.s32 %s24, %s36
      %p38 = scmp.eq.s32.totalorder %s37, 0
      %s40 = sadd.s32 %s39, 1
      %s41 = scalar_select %p38, %s39, %s40
      %p44 = pneg %p38
      %p45 = scmp.eq.s32.totalorder %s17, 3
      %p46 = por %p44, %p45
      %p47 = scmp.ne.s32.totalorder %s39, %s42
      %p48 = scmp.eq.s32.totalorder %s17, 0
      %p49 = por %p47, %p48
      %p50 = scmp.ne.s32.totalorder %s39, %s42
      %p51 = scmp.eq.s32.totalorder %s22, 3
      %p52 = por %p50, %p51
      %p53 = scmp.ne.s32.totalorder %s42, %s43
      %p54 = scmp.eq.s32.totalorder %s22, 0
      %p55 = por %p53, %p54
      %p56 = scmp.ne.s32.totalorder %s42, %s43
      %p57 = scmp.eq.s32.totalorder %s23, 3
      %p58 = por %p56, %p57
      %p60 = scmp.ne.s32.totalorder %s43, %s59
      %p61 = scmp.eq.s32.totalorder %s23, 0
      %p62 = por %p60, %p61
      %s63 = ssub.s32 %s25, %s32
      %p64 = scmp.eq.s32.totalorder %s63, 0
      %s66 = sadd.s32 %s65, 1
      %s67 = scalar_select %p64, %s65, %s66
      %p70 = pneg %p64
      %p71 = scmp.eq.s32.totalorder %s17, 3
      %p72 = por %p70, %p71
      %p73 = scmp.ne.s32.totalorder %s65, %s68
      %p74 = scmp.eq.s32.totalorder %s17, 0
      %p75 = por %p73, %p74
      %p76 = scmp.ne.s32.totalorder %s65, %s68
      %p77 = scmp.eq.s32.totalorder %s22, 3
      %p78 = por %p76, %p77
      %p79 = scmp.ne.s32.totalorder %s68, %s69
      %p80 = scmp.eq.s32.totalorder %s22, 0
      %p81 = por %p79, %p80
      %p82 = scmp.ne.s32.totalorder %s68, %s69
      %p83 = scmp.eq.s32.totalorder %s23, 3
      %p84 = por %p82, %p83
      %p86 = scmp.ne.s32.totalorder %s69, %s85
      %p87 = scmp.eq.s32.totalorder %s23, 0
      %p88 = por %p86, %p87
      %s89 = ssub.s32 %s25, %s32
      %p90 = scmp.eq.s32.totalorder %s89, 0
      %s92 = sadd.s32 %s91, 1
      %s93 = scalar_select %p90, %s91, %s92
      %p96 = pneg %p90
      %p97 = scmp.eq.s32.totalorder %s17, 3
      %p98 = por %p96, %p97
      %p99 = scmp.ne.s32.totalorder %s91, %s94
      %p100 = scmp.eq.s32.totalorder %s17, 0
      %p101 = por %p99, %p100
      %p102 = scmp.ne.s32.totalorder %s91, %s94
      %p103 = scmp.eq.s32.totalorder %s22, 3
      %p104 = por %p102, %p103
      %p105 = scmp.ne.s32.totalorder %s94, %s95
      %p106 = scmp.eq.s32.totalorder %s22, 0
      %p107 = por %p105, %p106
      %p108 = scmp.ne.s32.totalorder %s94, %s95
      %p109 = scmp.eq.s32.totalorder %s23, 3
      %p110 = por %p108, %p109
      %p112 = scmp.ne.s32.totalorder %s95, %s111
      %p113 = scmp.eq.s32.totalorder %s23, 0
      %p114 = por %p112, %p113
      %s115 = ssub.s32 %s25, %s32
      %p116 = scmp.eq.s32.totalorder %s115, 0
      %s118 = sadd.s32 %s117, 1
      %s119 = scalar_select %p116, %s117, %s118
      %p122 = pneg %p116
      %p123 = scmp.eq.s32.totalorder %s17, 3
      %p124 = por %p122, %p123
      %p125 = scmp.ne.s32.totalorder %s117, %s120
      %p126 = scmp.eq.s32.totalorder %s17, 0
      %p127 = por %p125, %p126
      %p128 = scmp.ne.s32.totalorder %s117, %s120
      %p129 = scmp.eq.s32.totalorder %s22, 3
      %p130 = por %p128, %p129
      %p131 = scmp.ne.s32.totalorder %s120, %s121
      %p132 = scmp.eq.s32.totalorder %s22, 0
      %p133 = por %p131, %p132
      %p134 = scmp.ne.s32.totalorder %s120, %s121
      %p135 = scmp.eq.s32.totalorder %s23, 3
      %p136 = por %p134, %p135
      %p138 = scmp.ne.s32.totalorder %s121, %s137
      %p139 = scmp.eq.s32.totalorder %s23, 0
      %p140 = por %p138, %p139
      %s141 = ssub.s32 %s25, %s32
      %p142 = scmp.eq.s32.totalorder %s141, 0
      %s144 = sadd.s32 %s143, 1
      %s145 = scalar_select %p142, %s143, %s144
      %p148 = pneg %p142
      %p149 = scmp.eq.s32.totalorder %s17, 3
      %p150 = por %p148, %p149
      %p151 = scmp.ne.s32.totalorder %s143, %s146
      %p152 = scmp.eq.s32.totalorder %s17, 0
      %p153 = por %p151, %p152
      %p154 = scmp.ne.s32.totalorder %s143, %s146
      %p155 = scmp.eq.s32.totalorder %s22, 3
      %p156 = por %p154, %p155
      %p157 = scmp.ne.s32.totalorder %s146, %s147
      %p158 = scmp.eq.s32.totalorder %s22, 0
      %p159 = por %p157, %p158
      %p160 = scmp.ne.s32.totalorder %s146, %s147
      %p161 = scmp.eq.s32.totalorder %s23, 3
      %p162 = por %p160, %p161
      %p164 = scmp.ne.s32.totalorder %s147, %s163
      %p165 = scmp.eq.s32.totalorder %s23, 0
      %p166 = por %p164, %p165
      %s167 = ssub.s32 %s25, %s32
      %p168 = scmp.eq.s32.totalorder %s167, 0
      %s170 = sadd.s32 %s169, 1
      %s171 = scalar_select %p168, %s169, %s170
      %p174 = pneg %p168
      %p175 = scmp.eq.s32.totalorder %s17, 3
      %p176 = por %p174, %p175
      %p177 = scmp.ne.s32.totalorder %s169, %s172
      %p178 = scmp.eq.s32.totalorder %s17, 0
      %p179 = por %p177, %p178
      %p180 = scmp.ne.s32.totalorder %s169, %s172
      %p181 = scmp.eq.s32.totalorder %s22, 3
      %p182 = por %p180, %p181
      %p183 = scmp.ne.s32.totalorder %s172, %s173
      %p184 = scmp.eq.s32.totalorder %s22, 0
      %p185 = por %p183, %p184
      %p186 = scmp.ne.s32.totalorder %s172, %s173
      %p187 = scmp.eq.s32.totalorder %s23, 3
      %p188 = por %p186, %p187
      %p190 = scmp.ne.s32.totalorder %s173, %s189
      %p191 = scmp.eq.s32.totalorder %s23, 0
      %p192 = por %p190, %p191
      %s193 = ssub.s32 %s25, %s32
      %p194 = scmp.eq.s32.totalorder %s193, 0
      %s196 = sadd.s32 %s195, 1
      %s197 = scalar_select %p194, %s195, %s196
      %p200 = pneg %p194
      %p201 = scmp.eq.s32.totalorder %s17, 3
      %p202 = por %p200, %p201
      %p203 = scmp.ne.s32.totalorder %s195, %s198
      %p204 = scmp.eq.s32.totalorder %s17, 0
      %p205 = por %p203, %p204
      %p206 = scmp.ne.s32.totalorder %s195, %s198
      %p207 = scmp.eq.s32.totalorder %s22, 3
      %p208 = por %p206, %p207
      %p209 = scmp.ne.s32.totalorder %s198, %s199
      %p210 = scmp.eq.s32.totalorder %s22, 0
      %p211 = por %p209, %p210
      %p212 = scmp.ne.s32.totalorder %s198, %s199
      %p213 = scmp.eq.s32.totalorder %s23, 3
      %p214 = por %p212, %p213
      %p216 = scmp.ne.s32.totalorder %s199, %s215
      %p217 = scmp.eq.s32.totalorder %s23, 0
      %p218 = por %p216, %p217
      %s219 = ssub.s32 %s25, %s32
      %p220 = scmp.eq.s32.totalorder %s219, 0
      %s222 = sadd.s32 %s221, 1
      %s223 = scalar_select %p220, %s221, %s222
      %p226 = pneg %p220
      %p227 = scmp.eq.s32.totalorder %s17, 3
      %p228 = por %p226, %p227
      %p229 = scmp.ne.s32.totalorder %s221, %s224
      %p230 = scmp.eq.s32.totalorder %s17, 0
      %p231 = por %p229, %p230
      %p232 = scmp.ne.s32.totalorder %s221, %s224
      %p233 = scmp.eq.s32.totalorder %s22, 3
      %p234 = por %p232, %p233
      %p235 = scmp.ne.s32.totalorder %s224, %s225
      %p236 = scmp.eq.s32.totalorder %s22, 0
      %p237 = por %p235, %p236
      %p238 = scmp.ne.s32.totalorder %s224, %s225
      %p239 = scmp.eq.s32.totalorder %s23, 3
      %p240 = por %p238, %p239
      %p242 = scmp.ne.s32.totalorder %s225, %s241
      %p243 = scmp.eq.s32.totalorder %s23, 0
      %p244 = por %p242, %p243
      %s245 = ssub.s32 %s24, %s36
      %p246 = scmp.eq.s32.totalorder %s245, 0
      %s248 = sadd.s32 %s247, 1
      %s249 = scalar_select %p246, %s247, %s248
      %p252 = pneg %p246
      %p253 = scmp.eq.s32.totalorder %s17, 3
      %p254 = por %p252, %p253
      %p255 = scmp.ne.s32.totalorder %s247, %s250
      %p256 = scmp.eq.s32.totalorder %s17, 0
      %p257 = por %p255, %p256
      %p258 = scmp.ne.s32.totalorder %s247, %s250
      %p259 = scmp.eq.s32.totalorder %s22, 3
      %p260 = por %p258, %p259
      %p261 = scmp.ne.s32.totalorder %s250, %s251
      %p262 = scmp.eq.s32.totalorder %s22, 0
      %p263 = por %p261, %p262
      %p264 = scmp.ne.s32.totalorder %s250, %s251
      %p265 = scmp.eq.s32.totalorder %s23, 3
      %p266 = por %p264, %p265
      %p268 = scmp.ne.s32.totalorder %s251, %s267
      %p269 = scmp.eq.s32.totalorder %s23, 0
      %p270 = por %p268, %p269
      %p271 = scmp.le.s32.totalorder 1, %s17
      %p272 = scmp.lt.s32.totalorder %s17, 5
      %p273 = pnand %p271, %p272
      %p274 = pneg %p273
      // Predicated region
      $region9: #{tpu_custom_call.1} parent=5 // pred_check
        _
      $region10: #{tpu_custom_call.1} parent=5 // pred_check_branch
        %276 = sbr.rel (%p273) target = $region12
      $region11: #{tpu_custom_call.1} parent=5 // pred_region
        %s277 = ssub.s32 %s17, 1
      $region12: #{tpu_custom_call.1} parent=5 // pred_fallthru
        _
      %p278 = scmp.lt.s32.totalorder %s17, 4
      // Predicated region
      $region13: #{tpu_custom_call.1} parent=5 // pred_check
        %p279 = pneg %p278
      $region14: #{tpu_custom_call.1} parent=5 // pred_check_branch
        %281 = sbr.rel (%p279) target = $region16
      $region15: #{tpu_custom_call.1} parent=5 // pred_region
        // Predicated region
        $region17: #{tpu_custom_call.1} parent=15 // pred_check
          %p282 = pneg %p49
        $region18: #{tpu_custom_call.1} parent=15 // pred_check_branch
          %284 = sbr.rel (%p282) target = $region20
        $region19: #{tpu_custom_call.1} parent=15 // pred_region
          %p285 = scmp.lt.s32.totalorder %s24, 1
          %s286 = scalar_select %p285, %s24, 1
          %s287 = smul.addr %s286, 8
          %s288 = scalar_lea.vmem %s0, %s287
        $region20: #{tpu_custom_call.1} parent=15 // pred_fallthru
          _
        // Predicated region
        $region21: #{tpu_custom_call.1} parent=15 // pred_check
          %p289 = pneg %p75
        $region22: #{tpu_custom_call.1} parent=15 // pred_check_branch
          %291 = sbr.rel (%p289) target = $region24
        $region23: #{tpu_custom_call.1} parent=15 // pred_region
          %p292 = scmp.lt.s32.totalorder %s25, 1
          %s293 = scalar_select %p292, %s25, 1
          %s294 = smul.addr %s293, 4
          %s295 = smul.addr %s294, 8
          %s296 = scalar_lea.vmem %s1, %s295
        $region24: #{tpu_custom_call.1} parent=15 // pred_fallthru
          _
        // Predicated region
        $region25: #{tpu_custom_call.1} parent=15 // pred_check
          %p297 = pneg %p101
        $region26: #{tpu_custom_call.1} parent=15 // pred_check_branch
          %299 = sbr.rel (%p297) target = $region28
        $region27: #{tpu_custom_call.1} parent=15 // pred_region
          %p300 = scmp.lt.s32.totalorder %s25, 1
          %s301 = scalar_select %p300, %s25, 1
          %s302 = smul.addr %s301, 4
          %s303 = smul.addr %s302, 8
          %s304 = scalar_lea.vmem %s2, %s303
        $region28: #{tpu_custom_call.1} parent=15 // pred_fallthru
          _
        // Predicated region
        $region29: #{tpu_custom_call.1} parent=15 // pred_check
          %p305 = pneg %p127
        $region30: #{tpu_custom_call.1} parent=15 // pred_check_branch
          %307 = sbr.rel (%p305) target = $region32
        $region31: #{tpu_custom_call.1} parent=15 // pred_region
          %p308 = scmp.lt.s32.totalorder %s25, 1
          %s309 = scalar_select %p308, %s25, 1
          %s310 = smul.addr %s309, 4
          %s311 = smul.addr %s310, 8
          %s312 = scalar_lea.vmem %s3, %s311
        $region32: #{tpu_custom_call.1} parent=15 // pred_fallthru
          _
        // Predicated region
        $region33: #{tpu_custom_call.1} parent=15 // pred_check
          %p313 = pneg %p153
        $region34: #{tpu_custom_call.1} parent=15 // pred_check_branch
          %315 = sbr.rel (%p313) target = $region36
        $region35: #{tpu_custom_call.1} parent=15 // pred_region
          %p316 = scmp.lt.s32.totalorder %s25, 1
          %s317 = scalar_select %p316, %s25, 1
          %s318 = smul.addr %s317, 8
          %s319 = smul.addr %s318, 8
          %s320 = scalar_lea.vmem %s4, %s319
        $region36: #{tpu_custom_call.1} parent=15 // pred_fallthru
          _
        // Predicated region
        $region37: #{tpu_custom_call.1} parent=15 // pred_check
          %p321 = pneg %p179
        $region38: #{tpu_custom_call.1} parent=15 // pred_check_branch
          %323 = sbr.rel (%p321) target = $region40
        $region39: #{tpu_custom_call.1} parent=15 // pred_region
          %p324 = scmp.lt.s32.totalorder %s25, 1
          %s325 = scalar_select %p324, %s25, 1
          %s326 = scalar_lea.vmem %s5, %s325
        $region40: #{tpu_custom_call.1} parent=15 // pred_fallthru
          _
        // Predicated region
        $region41: #{tpu_custom_call.1} parent=15 // pred_check
          %p327 = pneg %p205
        $region42: #{tpu_custom_call.1} parent=15 // pred_check_branch
          %329 = sbr.rel (%p327) target = $region44
        $region43: #{tpu_custom_call.1} parent=15 // pred_region
          %p330 = scmp.lt.s32.totalorder %s25, 1
          %s331 = scalar_select %p330, %s25, 1
          %s332 = scalar_lea.vmem %s6, %s331
        $region44: #{tpu_custom_call.1} parent=15 // pred_fallthru
          _
        // Predicated region
        $region45: #{tpu_custom_call.1} parent=15 // pred_check
          %p333 = pneg %p231
        $region46: #{tpu_custom_call.1} parent=15 // pred_check_branch
          %335 = sbr.rel (%p333) target = $region48
        $region47: #{tpu_custom_call.1} parent=15 // pred_region
          %p336 = scmp.lt.s32.totalorder %s25, 1
          %s337 = scalar_select %p336, %s25, 1
          %s338 = smul.addr %s337, 8
          %s339 = scalar_lea.vmem %s7, %s338
        $region48: #{tpu_custom_call.1} parent=15 // pred_fallthru
          _
      $region16: #{tpu_custom_call.1} parent=5 // pred_fallthru
        _
      %p340 = scmp.le.s32.totalorder 1, %s17
      %p341 = scmp.lt.s32.totalorder %s17, 5
      %p342 = pnand %p340, %p341
      %p343 = pneg %p342
      // Predicated region
      $region49: #{tpu_custom_call.1} parent=5 // pred_check
        _
      $region50: #{tpu_custom_call.1} parent=5 // pred_check_branch
        %345 = sbr.rel (%p342) target = $region52
      $region51: #{tpu_custom_call.1} parent=5 // pred_region
        %s346 = ssub.s32 %s17, 1
        %p347 = scmp.lt.s32.totalorder %s26, 1
        %s348 = scalar_select %p347, %s26, 1
        %s349 = smul.addr %s348, 8
        %s350 = scalar_lea.vmem %s0, %s349
        %p351 = pneg %p55
        %p352 = pneg %p52
        %p353 = scmp.lt.s32.totalorder %s27, 1
        %s354 = scalar_select %p353, %s27, 1
        %s355 = smul.addr %s354, 4
        %s356 = smul.addr %s355, 8
        %s357 = scalar_lea.vmem %s1, %s356
        %p358 = pneg %p81
        %p359 = pneg %p78
        %p360 = scmp.lt.s32.totalorder %s27, 1
        %s361 = scalar_select %p360, %s27, 1
        %s362 = smul.addr %s361, 4
        %s363 = smul.addr %s362, 8
        %s364 = scalar_lea.vmem %s2, %s363
        %p365 = pneg %p107
        %p366 = pneg %p104
        %p367 = scmp.lt.s32.totalorder %s27, 1
        %s368 = scalar_select %p367, %s27, 1
        %s369 = smul.addr %s368, 4
        %s370 = smul.addr %s369, 8
        %s371 = scalar_lea.vmem %s3, %s370
        %p372 = pneg %p133
        %p373 = pneg %p130
        %p374 = scmp.lt.s32.totalorder %s27, 1
        %s375 = scalar_select %p374, %s27, 1
        %s376 = smul.addr %s375, 8
        %s377 = smul.addr %s376, 8
        %s378 = scalar_lea.vmem %s4, %s377
        %p379 = pneg %p159
        %p380 = pneg %p156
        %p381 = scmp.lt.s32.totalorder %s27, 1
        %s382 = scalar_select %p381, %s27, 1
        %s383 = scalar_lea.vmem %s5, %s382
        %p384 = pneg %p185
        %p385 = pneg %p182
        %p386 = scmp.lt.s32.totalorder %s27, 1
        %s387 = scalar_select %p386, %s27, 1
        %s388 = scalar_lea.vmem %s6, %s387
        %p389 = pneg %p211
        %p390 = pneg %p208
        %p391 = scmp.lt.s32.totalorder %s27, 1
        %s392 = scalar_select %p391, %s27, 1
        %s393 = smul.addr %s392, 8
        %s394 = scalar_lea.vmem %s7, %s393
        %p395 = pneg %p237
        %p396 = pneg %p234
        %p397 = pneg %p263
        %p398 = pneg %p260
        %s399 = sand.u32 %s250, 1
        %s400 = scalar_lea.sflag [#allocation4], %s399
        %s401 = sand.u32 %s250, 1
        %s402 = smul.addr %s401, 8
        %s403 = scalar_lea.vmem [#allocation3], %s402
        %p404 = scmp.lt.s32.totalorder %s26, 1
        %s405 = scalar_select %p404, %s26, 1
        %s406 = smul.addr %s405, 8
        %s407 = scalar_lea.vmem %s0, %s406
        %p408 = scmp.lt.s32.totalorder %s27, 1
        %s409 = scalar_select %p408, %s27, 1
        %s410 = smul.addr %s409, 4
        %s411 = smul.addr %s410, 8
        %s412 = scalar_lea.vmem %s1, %s411
        %p413 = scmp.lt.s32.totalorder %s27, 1
        %s414 = scalar_select %p413, %s27, 1
        %s415 = smul.addr %s414, 4
        %s416 = smul.addr %s415, 8
        %s417 = scalar_lea.vmem %s2, %s416
        %p418 = scmp.lt.s32.totalorder %s27, 1
        %s419 = scalar_select %p418, %s27, 1
        %s420 = smul.addr %s419, 4
        %s421 = smul.addr %s420, 8
        %s422 = scalar_lea.vmem %s3, %s421
        %p423 = scmp.lt.s32.totalorder %s27, 1
        %s424 = scalar_select %p423, %s27, 1
        %s425 = smul.addr %s424, 8
        %s426 = smul.addr %s425, 8
        %s427 = scalar_lea.vmem %s4, %s426
        %p428 = scmp.lt.s32.totalorder %s27, 1
        %s429 = scalar_select %p428, %s27, 1
        %s430 = scalar_lea.vmem %s5, %s429
        %p431 = scmp.lt.s32.totalorder %s27, 1
        %s432 = scalar_select %p431, %s27, 1
        %s433 = scalar_lea.vmem %s6, %s432
        %p434 = scmp.lt.s32.totalorder %s27, 1
        %s435 = scalar_select %p434, %s27, 1
        %s436 = smul.addr %s435, 8
        %s437 = scalar_lea.vmem %s7, %s436
        %p438 = scmp.eq.s32.totalorder %s27, 0
        // Predicated region
        $region53: #{tpu_custom_call.1} parent=51 // pred_check
          %p439 = pneg %p438
        $region54: #{tpu_custom_call.1} parent=51 // pred_check_branch
          %441 = sbr.rel (%p439) target = $region56
        $region55: #{tpu_custom_call.1} parent=51 // pred_region
          %v442 = vld [vmem:[%s407] sm:$0xff]
          %vm443 = vcmask 261120
          %444 = vst.msk [vmem:[#allocation2] sm:$0xff] %vm443, %v442
        $region56: #{tpu_custom_call.1} parent=51 // pred_fallthru
          _
        %v445 = vld [vmem:[#allocation2] sm:$0xff]
        %v446 = vld [vmem:[%s412] sm:$0xff]
        %v447 = vld [vmem:[%s412 + $0x8] sm:$0xff]
        %v448 = vld [vmem:[%s412 + $0x10] sm:$0xff]
        %v449 = vld [vmem:[%s412 + $0x18] sm:$0xff]
        %v450 = vld [vmem:[%s430] sm:$0x1]
        %v452 = vperm.slane %v450, 0
        %vm454 = vcmask 261120
        %v456 = vsel %vm454, %v445, 0
        %458 = vmatpush.msra.mxu0 0.0
        %459 = vmatpush.msra.mxu0 0.0
        %460 = vmatpush.msra.mxu0 0.0
        %461 = vmatpush.msra.mxu0 0.0
        %462 = vmatpush.msra.mxu0 0.0
        %463 = vmatpush.msra.mxu0 0.0
        %464 = vmatpush.msra.mxu0 0.0
        %465 = vmatpush.msra.mxu0 0.0
        %466 = vmatpush.msra.mxu0 0.0
        %467 = vmatpush.msra.mxu0 0.0
        %468 = vmatpush.msra.mxu0 0.0
        %469 = vmatpush.msra.mxu0 0.0
        %470 = vmatpush.msra.mxu0 %v449
        %471 = vmatpush.msra.mxu0 %v448
        %472 = vmatpush.msra.mxu0 %v447
        %473 = vmatpush.msra.mxu0 %v446
        %474 = vmatmul.f32.gmra.mxu0 %v456
        %v475 = vpop.f32.mrf.mxu0
        %v476 = vadd.f32 %v452, %v475
        %477 = vdwg.mxu0
        %479 = vrot.lane.b32.xlu0 %v476, 120
        %v480 = vpop.permute.xlu0 %479
        %482 = vrot.lane.b32.xlu0 %v476, 112
        %v483 = vpop.permute.xlu0 %482
        %485 = vrot.lane.b32.xlu0 %v476, 104
        %v486 = vpop.permute.xlu0 %485
        %488 = vrot.lane.b32.xlu0 %v476, 96
        %v489 = vpop.permute.xlu0 %488
        %491 = vrot.lane.b32.xlu0 %v476, 88
        %v492 = vpop.permute.xlu0 %491
        %494 = vrot.lane.b32.xlu0 %v476, 80
        %v495 = vpop.permute.xlu0 %494
        %497 = vrot.lane.b32.xlu0 %v476, 72
        %v498 = vpop.permute.xlu0 %497
        %500 = vrot.lane.b32.xlu0 %v476, 64
        %v501 = vpop.permute.xlu0 %500
        %503 = vrot.lane.b32.xlu0 %v476, 56
        %v504 = vpop.permute.xlu0 %503
        %506 = vrot.lane.b32.xlu0 %v476, 48
        %v507 = vpop.permute.xlu0 %506
        %509 = vrot.lane.b32.xlu0 %v476, 40
        %v510 = vpop.permute.xlu0 %509
        %v512 = vrot.slane %v483, 4
        %vm513 = vcmask 1047556
        %v514 = vsel %vm513, %v512, %v476
        %v515 = vrot.slane %v476, 4
        %v516 = vsel %vm513, %v483, %v515
        %v518 = vunpack.c.l.s4 1983009808
        %v519 = vunpack.c.0.s8 %v518
        %v520 = vperm.slane %v514, %v519
        %v522 = vunpack.c.l.s4 1983009808
        %v523 = vunpack.c.0.s8 %v522
        %v524 = vperm.slane %v516, %v523
        %v525 = vrot.slane %v486, 4
        %v526 = vsel %vm513, %v525, %v480
        %v527 = vrot.slane %v480, 4
        %v528 = vsel %vm513, %v486, %v527
        %v530 = vunpack.c.l.s4 1983009808
        %v531 = vunpack.c.0.s8 %v530
        %v532 = vperm.slane %v526, %v531
        %v534 = vunpack.c.l.s4 1983009808
        %v535 = vunpack.c.0.s8 %v534
        %v536 = vperm.slane %v528, %v535
        %v537 = vrot.slane %v495, 4
        %v538 = vsel %vm513, %v537, %v489
        %v539 = vrot.slane %v489, 4
        %v540 = vsel %vm513, %v495, %v539
        %v542 = vunpack.c.l.s4 1983009808
        %v543 = vunpack.c.0.s8 %v542
        %v544 = vperm.slane %v538, %v543
        %v546 = vunpack.c.l.s4 1983009808
        %v547 = vunpack.c.0.s8 %v546
        %v548 = vperm.slane %v540, %v547
        %v549 = vrot.slane %v498, 4
        %v550 = vsel %vm513, %v549, %v492
        %v551 = vrot.slane %v492, 4
        %v552 = vsel %vm513, %v498, %v551
        %v554 = vunpack.c.l.s4 1983009808
        %v555 = vunpack.c.0.s8 %v554
        %v556 = vperm.slane %v550, %v555
        %v558 = vunpack.c.l.s4 1983009808
        %v559 = vunpack.c.0.s8 %v558
        %v560 = vperm.slane %v552, %v559
        %v561 = vrot.slane %v532, 4
        %v562 = vsel %vm513, %v561, %v520
        %v563 = vrot.slane %v520, 4
        %v564 = vsel %vm513, %v532, %v563
        %v566 = vunpack.c.l.s4 1934713408
        %v567 = vunpack.c.0.s8 %v566
        %v568 = vperm.slane %v562, %v567
        %v570 = vunpack.c.l.s4 1934713408
        %v571 = vunpack.c.0.s8 %v570
        %v572 = vperm.slane %v564, %v571
        %v573 = vrot.slane %v536, 4
        %v574 = vsel %vm513, %v573, %v524
        %v575 = vrot.slane %v524, 4
        %v576 = vsel %vm513, %v536, %v575
        %v578 = vunpack.c.l.s4 1934713408
        %v579 = vunpack.c.0.s8 %v578
        %v580 = vperm.slane %v574, %v579
        %v582 = vunpack.c.l.s4 1934713408
        %v583 = vunpack.c.0.s8 %v582
        %v584 = vperm.slane %v576, %v583
        %v585 = vrot.slane %v556, 4
        %v586 = vsel %vm513, %v585, %v544
        %v587 = vrot.slane %v544, 4
        %v588 = vsel %vm513, %v556, %v587
        %v590 = vunpack.c.l.s4 1934713408
        %v591 = vunpack.c.0.s8 %v590
        %v592 = vperm.slane %v586, %v591
        %v594 = vunpack.c.l.s4 1934713408
        %v595 = vunpack.c.0.s8 %v594
        %v596 = vperm.slane %v588, %v595
        %v597 = vrot.slane %v560, 4
        %v598 = vsel %vm513, %v597, %v548
        %v599 = vrot.slane %v548, 4
        %v600 = vsel %vm513, %v560, %v599
        %v602 = vunpack.c.l.s4 1934713408
        %v603 = vunpack.c.0.s8 %v602
        %v604 = vperm.slane %v598, %v603
        %v606 = vunpack.c.l.s4 1934713408
        %v607 = vunpack.c.0.s8 %v606
        %v608 = vperm.slane %v600, %v607
        %v609 = vrot.slane %v592, 4
        %v610 = vsel %vm513, %v609, %v568
        %v611 = vrot.slane %v568, 4
        %v612 = vsel %vm513, %v592, %v611
        %v613 = vrot.slane %v596, 4
        %v614 = vsel %vm513, %v613, %v572
        %v615 = vrot.slane %v572, 4
        %v616 = vsel %vm513, %v596, %v615
        %v617 = vrot.slane %v604, 4
        %v618 = vsel %vm513, %v617, %v580
        %v619 = vrot.slane %v580, 4
        %v620 = vsel %vm513, %v604, %v619
        %v621 = vrot.slane %v608, 4
        %v622 = vsel %vm513, %v621, %v584
        %v623 = vrot.slane %v584, 4
        %v624 = vsel %vm513, %v608, %v623
        %v625 = vrot.slane %v507, 4
        %v626 = vsel %vm513, %v625, %v501
        %v627 = vrot.slane %v501, 4
        %v628 = vsel %vm513, %v507, %v627
        %v630 = vunpack.c.l.s4 1983009808
        %v631 = vunpack.c.0.s8 %v630
        %v632 = vperm.slane %v626, %v631
        %v634 = vunpack.c.l.s4 1983009808
        %v635 = vunpack.c.0.s8 %v634
        %v636 = vperm.slane %v628, %v635
        %v637 = vrot.slane %v510, 4
        %v638 = vsel %vm513, %v637, %v504
        %v639 = vrot.slane %v504, 4
        %v640 = vsel %vm513, %v510, %v639
        %v642 = vunpack.c.l.s4 1983009808
        %v643 = vunpack.c.0.s8 %v642
        %v644 = vperm.slane %v638, %v643
        %v646 = vunpack.c.l.s4 1983009808
        %v647 = vunpack.c.0.s8 %v646
        %v648 = vperm.slane %v640, %v647
        %v649 = vrot.slane %v644, 4
        %v650 = vsel %vm513, %v649, %v632
        %v651 = vrot.slane %v632, 4
        %v652 = vsel %vm513, %v644, %v651
        %v654 = vunpack.c.l.s4 1934713408
        %v655 = vunpack.c.0.s8 %v654
        %v656 = vperm.slane %v650, %v655
        %v658 = vunpack.c.l.s4 1934713408
        %v659 = vunpack.c.0.s8 %v658
        %v660 = vperm.slane %v652, %v659
        %v661 = vrot.slane %v648, 4
        %v662 = vsel %vm513, %v661, %v636
        %v663 = vrot.slane %v636, 4
        %v664 = vsel %vm513, %v648, %v663
        %v666 = vunpack.c.l.s4 1934713408
        %v667 = vunpack.c.0.s8 %v666
        %v668 = vperm.slane %v662, %v667
        %v670 = vunpack.c.l.s4 1934713408
        %v671 = vunpack.c.0.s8 %v670
        %v672 = vperm.slane %v664, %v671
        %v673 = vrot.slane %v656, 4
        %v674 = vsel %vm513, 0.0, %v673
        %v675 = vrot.slane %v660, 4
        %v676 = vsel %vm513, 0.0, %v675
        %v677 = vrot.slane %v668, 4
        %v678 = vsel %vm513, 0.0, %v677
        %v679 = vrot.slane %v672, 4
        %v680 = vsel %vm513, 0.0, %v679
        %v681 = vrot.slane %v614, 4
        %v682 = vsel %vm513, %v681, %v610
        %v683 = vrot.slane %v610, 4
        %v684 = vsel %vm513, %v614, %v683
        %v686 = vunpack.c.l.s4 1983009808
        %v687 = vunpack.c.0.s8 %v686
        %v688 = vperm.slane %v682, %v687
        %v690 = vunpack.c.l.s4 1983009808
        %v691 = vunpack.c.0.s8 %v690
        %v692 = vperm.slane %v684, %v691
        %v693 = vrot.slane %v616, 4
        %v694 = vsel %vm513, %v693, %v612
        %v695 = vrot.slane %v612, 4
        %v696 = vsel %vm513, %v616, %v695
        %v698 = vunpack.c.l.s4 1983009808
        %v699 = vunpack.c.0.s8 %v698
        %v700 = vperm.slane %v694, %v699
        %v702 = vunpack.c.l.s4 1983009808
        %v703 = vunpack.c.0.s8 %v702
        %v704 = vperm.slane %v696, %v703
        %v705 = vrot.slane %v622, 4
        %v706 = vsel %vm513, %v705, %v618
        %v707 = vrot.slane %v618, 4
        %v708 = vsel %vm513, %v622, %v707
        %v710 = vunpack.c.l.s4 1983009808
        %v711 = vunpack.c.0.s8 %v710
        %v712 = vperm.slane %v706, %v711
        %v714 = vunpack.c.l.s4 1983009808
        %v715 = vunpack.c.0.s8 %v714
        %v716 = vperm.slane %v708, %v715
        %v717 = vrot.slane %v624, 4
        %v718 = vsel %vm513, %v717, %v620
        %v719 = vrot.slane %v620, 4
        %v720 = vsel %vm513, %v624, %v719
        %v722 = vunpack.c.l.s4 1983009808
        %v723 = vunpack.c.0.s8 %v722
        %v724 = vperm.slane %v718, %v723
        %v726 = vunpack.c.l.s4 1983009808
        %v727 = vunpack.c.0.s8 %v726
        %v728 = vperm.slane %v720, %v727
        %v729 = vrot.slane %v700, 4
        %v730 = vsel %vm513, %v729, %v688
        %v731 = vrot.slane %v688, 4
        %v732 = vsel %vm513, %v700, %v731
        %v734 = vunpack.c.l.s4 1934713408
        %v735 = vunpack.c.0.s8 %v734
        %v736 = vperm.slane %v730, %v735
        %v738 = vunpack.c.l.s4 1934713408
        %v739 = vunpack.c.0.s8 %v738
        %v740 = vperm.slane %v732, %v739
        %v741 = vrot.slane %v704, 4
        %v742 = vsel %vm513, %v741, %v692
        %v743 = vrot.slane %v692, 4
        %v744 = vsel %vm513, %v704, %v743
        %v746 = vunpack.c.l.s4 1934713408
        %v747 = vunpack.c.0.s8 %v746
        %v748 = vperm.slane %v742, %v747
        %v750 = vunpack.c.l.s4 1934713408
        %v751 = vunpack.c.0.s8 %v750
        %v752 = vperm.slane %v744, %v751
        %v753 = vrot.slane %v724, 4
        %v754 = vsel %vm513, %v753, %v712
        %v755 = vrot.slane %v712, 4
        %v756 = vsel %vm513, %v724, %v755
        %v758 = vunpack.c.l.s4 1934713408
        %v759 = vunpack.c.0.s8 %v758
        %v760 = vperm.slane %v754, %v759
        %v762 = vunpack.c.l.s4 1934713408
        %v763 = vunpack.c.0.s8 %v762
        %v764 = vperm.slane %v756, %v763
        %v765 = vrot.slane %v728, 4
        %v766 = vsel %vm513, %v765, %v716
        %v767 = vrot.slane %v716, 4
        %v768 = vsel %vm513, %v728, %v767
        %v770 = vunpack.c.l.s4 1934713408
        %v771 = vunpack.c.0.s8 %v770
        %v772 = vperm.slane %v766, %v771
        %v774 = vunpack.c.l.s4 1934713408
        %v775 = vunpack.c.0.s8 %v774
        %v776 = vperm.slane %v768, %v775
        %v777 = vrot.slane %v760, 4
        %v778 = vsel %vm513, %v777, %v736
        %v779 = vrot.slane %v736, 4
        %v780 = vsel %vm513, %v760, %v779
        %v781 = vrot.slane %v764, 4
        %v782 = vsel %vm513, %v781, %v740
        %v783 = vrot.slane %v740, 4
        %v784 = vsel %vm513, %v764, %v783
        %v785 = vrot.slane %v772, 4
        %v786 = vsel %vm513, %v785, %v748
        %v787 = vrot.slane %v748, 4
        %v788 = vsel %vm513, %v772, %v787
        %v789 = vrot.slane %v776, 4
        %v790 = vsel %vm513, %v789, %v752
        %v791 = vrot.slane %v752, 4
        %v792 = vsel %vm513, %v776, %v791
        %v793 = vsel %vm513, %v675, %v656
        %v795 = vunpack.c.l.s4 1983009808
        %v796 = vunpack.c.0.s8 %v795
        %v797 = vperm.slane %v793, %v796
        %v798 = vrot.slane %v676, 4
        %v799 = vsel %vm513, %v798, %v674
        %v801 = vunpack.c.l.s4 1983009808
        %v802 = vunpack.c.0.s8 %v801
        %v803 = vperm.slane %v799, %v802
        %v804 = vsel %vm513, %v679, %v668
        %v806 = vunpack.c.l.s4 1983009808
        %v807 = vunpack.c.0.s8 %v806
        %v808 = vperm.slane %v804, %v807
        %v809 = vrot.slane %v680, 4
        %v810 = vsel %vm513, %v809, %v678
        %v812 = vunpack.c.l.s4 1983009808
        %v813 = vunpack.c.0.s8 %v812
        %v814 = vperm.slane %v810, %v813
        %v815 = vrot.slane %v803, 4
        %v816 = vsel %vm513, %v815, %v797
        %v817 = vrot.slane %v797, 4
        %v818 = vsel %vm513, %v803, %v817
        %v820 = vunpack.c.l.s4 1934713408
        %v821 = vunpack.c.0.s8 %v820
        %v822 = vperm.slane %v816, %v821
        %v824 = vunpack.c.l.s4 1934713408
        %v825 = vunpack.c.0.s8 %v824
        %v826 = vperm.slane %v818, %v825
        %v827 = vrot.slane %v814, 4
        %v828 = vsel %vm513, %v827, %v808
        %v829 = vrot.slane %v808, 4
        %v830 = vsel %vm513, %v814, %v829
        %v832 = vunpack.c.l.s4 1934713408
        %v833 = vunpack.c.0.s8 %v832
        %v834 = vperm.slane %v828, %v833
        %v836 = vunpack.c.l.s4 1934713408
        %v837 = vunpack.c.0.s8 %v836
        %v838 = vperm.slane %v830, %v837
        %v839 = vrot.slane %v834, 4
        %v840 = vsel %vm513, %v839, %v822
        %v841 = vrot.slane %v822, 4
        %v842 = vsel %vm513, %v834, %v841
        %v843 = vrot.slane %v838, 4
        %v844 = vsel %vm513, %v843, %v826
        %v845 = vrot.slane %v826, 4
        %v846 = vsel %vm513, %v838, %v845
        %vm847 = vcmask 64512
        %v849 = vsel %vm847, %v778, 0
        %v852 = vsel %vm847, %v786, 0
        %854 = vmatpush.xpose.msra.mxu0 0.0
        %855 = vmatpush.xpose.msra.mxu0 0.0
        %856 = vmatpush.xpose.msra.mxu0 0.0
        %857 = vmatpush.xpose.msra.mxu0 0.0
        %858 = vmatpush.xpose.msra.mxu0 0.0
        %859 = vmatpush.xpose.msra.mxu0 0.0
        %860 = vmatpush.xpose.msra.mxu0 0.0
        %861 = vmatpush.xpose.msra.mxu0 0.0
        %862 = vmatpush.xpose.msra.mxu0 0.0
        %863 = vmatpush.xpose.msra.mxu0 0.0
        %864 = vmatpush.xpose.msra.mxu0 0.0
        %865 = vmatpush.xpose.msra.mxu0 0.0
        %866 = vmatpush.xpose.msra.mxu0 0.0
        %867 = vmatpush.xpose.msra.mxu0 0.0
        %868 = vmatpush.xpose.msra.mxu0 0.0
        %869 = vmatpush.xpose.msra.mxu0 %v852
        %870 = vmatmul.f32.gmra.mxu0 %v849
        %v871 = vpop.f32.mrf.mxu0
        %v872 = vadd.f32 0.0, %v871
        %873 = vdwg.mxu0
        %v875 = vsel %vm847, %v780, 0
        %v878 = vsel %vm847, %v788, 0
        %880 = vmatpush.xpose.msra.mxu0 0.0
        %881 = vmatpush.xpose.msra.mxu0 0.0
        %882 = vmatpush.xpose.msra.mxu0 0.0
        %883 = vmatpush.xpose.msra.mxu0 0.0
        %884 = vmatpush.xpose.msra.mxu0 0.0
        %885 = vmatpush.xpose.msra.mxu0 0.0
        %886 = vmatpush.xpose.msra.mxu0 0.0
        %887 = vmatpush.xpose.msra.mxu0 0.0
        %888 = vmatpush.xpose.msra.mxu0 0.0
        %889 = vmatpush.xpose.msra.mxu0 0.0
        %890 = vmatpush.xpose.msra.mxu0 0.0
        %891 = vmatpush.xpose.msra.mxu0 0.0
        %892 = vmatpush.xpose.msra.mxu0 0.0
        %893 = vmatpush.xpose.msra.mxu0 0.0
        %894 = vmatpush.xpose.msra.mxu0 0.0
        %895 = vmatpush.xpose.msra.mxu0 %v878
        %896 = vmatmul.f32.gmra.mxu0 %v875
        %v897 = vpop.f32.mrf.mxu0
        %v898 = vadd.f32 0.0, %v897
        %899 = vdwg.mxu0
        %v901 = vsel %vm847, %v782, 0
        %v904 = vsel %vm847, %v790, 0
        %906 = vmatpush.xpose.msra.mxu0 0.0
        %907 = vmatpush.xpose.msra.mxu0 0.0
        %908 = vmatpush.xpose.msra.mxu0 0.0
        %909 = vmatpush.xpose.msra.mxu0 0.0
        %910 = vmatpush.xpose.msra.mxu0 0.0
        %911 = vmatpush.xpose.msra.mxu0 0.0
        %912 = vmatpush.xpose.msra.mxu0 0.0
        %913 = vmatpush.xpose.msra.mxu0 0.0
        %914 = vmatpush.xpose.msra.mxu0 0.0
        %915 = vmatpush.xpose.msra.mxu0 0.0
        %916 = vmatpush.xpose.msra.mxu0 0.0
        %917 = vmatpush.xpose.msra.mxu0 0.0
        %918 = vmatpush.xpose.msra.mxu0 0.0
        %919 = vmatpush.xpose.msra.mxu0 0.0
        %920 = vmatpush.xpose.msra.mxu0 0.0
        %921 = vmatpush.xpose.msra.mxu0 %v904
        %922 = vmatmul.f32.gmra.mxu0 %v901
        %v923 = vpop.f32.mrf.mxu0
        %v924 = vadd.f32 0.0, %v923
        %925 = vdwg.mxu0
        %v927 = vsel %vm847, %v784, 0
        %v930 = vsel %vm847, %v792, 0
        %932 = vmatpush.xpose.msra.mxu0 0.0
        %933 = vmatpush.xpose.msra.mxu0 0.0
        %934 = vmatpush.xpose.msra.mxu0 0.0
        %935 = vmatpush.xpose.msra.mxu0 0.0
        %936 = vmatpush.xpose.msra.mxu0 0.0
        %937 = vmatpush.xpose.msra.mxu0 0.0
        %938 = vmatpush.xpose.msra.mxu0 0.0
        %939 = vmatpush.xpose.msra.mxu0 0.0
        %940 = vmatpush.xpose.msra.mxu0 0.0
        %941 = vmatpush.xpose.msra.mxu0 0.0
        %942 = vmatpush.xpose.msra.mxu0 0.0
        %943 = vmatpush.xpose.msra.mxu0 0.0
        %944 = vmatpush.xpose.msra.mxu0 0.0
        %945 = vmatpush.xpose.msra.mxu0 0.0
        %946 = vmatpush.xpose.msra.mxu0 0.0
        %947 = vmatpush.xpose.msra.mxu0 %v930
        %948 = vmatmul.f32.gmra.mxu0 %v927
        %v949 = vpop.f32.mrf.mxu0
        %v950 = vadd.f32 0.0, %v949
        %951 = vdwg.mxu0
        %v952 = vmul.f32 %v872, 0.35355338
        %v953 = vmul.f32 %v898, 0.35355338
        %v954 = vmul.f32 %v924, 0.35355338
        %v955 = vmul.f32 %v950, 0.35355338
        %v956 = vsel %vm847, %v952, -inf
        %957 = vmax.xlane.f32.xlu0 %v956
        %v958 = vpop.xlane.xlu0 %957
        %v959 = vsel %vm847, %v953, -inf
        %960 = vmax.xlane.f32.xlu0 %v959
        %v961 = vpop.xlane.xlu0 %960
        %v962 = vsel %vm847, %v954, -inf
        %963 = vmax.xlane.f32.xlu0 %v962
        %v964 = vpop.xlane.xlu0 %963
        %v965 = vsel %vm847, %v955, -inf
        %966 = vmax.xlane.f32.xlu0 %v965
        %v967 = vpop.xlane.xlu0 %966
        %v968 = vsub.f32 %v952, %v958
        %v969 = vsub.f32 %v953, %v961
        %v970 = vsub.f32 %v954, %v964
        %v971 = vsub.f32 %v955, %v967
        %v972 = vmul.f32 %v968, 1.442695
        %v973 = vpow.pop %v972
        %v974 = vmul.f32 %v969, 1.442695
        %v975 = vpow.pop %v974
        %v976 = vmul.f32 %v970, 1.442695
        %v977 = vpow.pop %v976
        %v978 = vmul.f32 %v971, 1.442695
        %v979 = vpow.pop %v978
        %v980 = vsel %vm847, %v973, 0.0
        %981 = vadd.xlane.f32.xlu0 %v980
        %v982 = vpop.xlane.xlu0 %981
        %v983 = vsel %vm847, %v975, 0.0
        %984 = vadd.xlane.f32.xlu0 %v983
        %v985 = vpop.xlane.xlu0 %984
        %v986 = vsel %vm847, %v977, 0.0
        %987 = vadd.xlane.f32.xlu0 %v986
        %v988 = vpop.xlane.xlu0 %987
        %v989 = vsel %vm847, %v979, 0.0
        %990 = vadd.xlane.f32.xlu0 %v989
        %v991 = vpop.xlane.xlu0 %990
        %v992 = vrcp.pop %v982
        %v993 = vrcp.pop %v985
        %v994 = vrcp.pop %v988
        %v995 = vrcp.pop %v991
        %v996 = vmul.f32 %v982, %v992
        %v997 = vmul.f32 %v985, %v993
        %v998 = vmul.f32 %v988, %v994
        %v999 = vmul.f32 %v991, %v995
        %v1000 = vsub.f32 2.0, %v996
        %v1001 = vsub.f32 2.0, %v997
        %v1002 = vsub.f32 2.0, %v998
        %v1003 = vsub.f32 2.0, %v999
        %v1004 = vmul.f32 %v992, %v1000
        %v1005 = vmul.f32 %v993, %v1001
        %v1006 = vmul.f32 %v994, %v1002
        %v1007 = vmul.f32 %v995, %v1003
        %v1008 = vmul.f32 %v973, %v1004
        %v1009 = vmul.f32 %v975, %v1005
        %v1010 = vmul.f32 %v977, %v1006
        %v1011 = vmul.f32 %v979, %v1007
        %v1013 = vsel %vm847, %v1008, 0
        %1015 = vmatpush.msra.mxu0 0.0
        %1016 = vmatpush.msra.mxu0 0.0
        %1017 = vmatpush.msra.mxu0 0.0
        %1018 = vmatpush.msra.mxu0 0.0
        %1019 = vmatpush.msra.mxu0 0.0
        %1020 = vmatpush.msra.mxu0 0.0
        %1021 = vmatpush.msra.mxu0 0.0
        %1022 = vmatpush.msra.mxu0 0.0
        %1023 = vmatpush.msra.mxu0 0.0
        %1024 = vmatpush.msra.mxu0 0.0
        %1025 = vmatpush.msra.mxu0 0.0
        %1026 = vmatpush.msra.mxu0 0.0
        %1027 = vmatpush.msra.mxu0 0.0
        %1028 = vmatpush.msra.mxu0 0.0
        %1029 = vmatpush.msra.mxu0 0.0
        %1030 = vmatpush.msra.mxu0 %v840
        %1031 = vmatmul.f32.gmra.mxu0 %v1013
        %v1032 = vpop.f32.mrf.mxu0
        %v1033 = vadd.f32 0.0, %v1032
        %1034 = vdwg.mxu0
        %v1036 = vsel %vm847, %v1009, 0
        %1038 = vmatpush.msra.mxu0 0.0
        %1039 = vmatpush.msra.mxu0 0.0
        %1040 = vmatpush.msra.mxu0 0.0
        %1041 = vmatpush.msra.mxu0 0.0
        %1042 = vmatpush.msra.mxu0 0.0
        %1043 = vmatpush.msra.mxu0 0.0
        %1044 = vmatpush.msra.mxu0 0.0
        %1045 = vmatpush.msra.mxu0 0.0
        %1046 = vmatpush.msra.mxu0 0.0
        %1047 = vmatpush.msra.mxu0 0.0
        %1048 = vmatpush.msra.mxu0 0.0
        %1049 = vmatpush.msra.mxu0 0.0
        %1050 = vmatpush.msra.mxu0 0.0
        %1051 = vmatpush.msra.mxu0 0.0
        %1052 = vmatpush.msra.mxu0 0.0
        %1053 = vmatpush.msra.mxu0 %v842
        %1054 = vmatmul.f32.gmra.mxu0 %v1036
        %v1055 = vpop.f32.mrf.mxu0
        %v1056 = vadd.f32 0.0, %v1055
        %1057 = vdwg.mxu0
        %v1059 = vsel %vm847, %v1010, 0
        %1061 = vmatpush.msra.mxu0 0.0
        %1062 = vmatpush.msra.mxu0 0.0
        %1063 = vmatpush.msra.mxu0 0.0
        %1064 = vmatpush.msra.mxu0 0.0
        %1065 = vmatpush.msra.mxu0 0.0
        %1066 = vmatpush.msra.mxu0 0.0
        %1067 = vmatpush.msra.mxu0 0.0
        %1068 = vmatpush.msra.mxu0 0.0
        %1069 = vmatpush.msra.mxu0 0.0
        %1070 = vmatpush.msra.mxu0 0.0
        %1071 = vmatpush.msra.mxu0 0.0
        %1072 = vmatpush.msra.mxu0 0.0
        %1073 = vmatpush.msra.mxu0 0.0
        %1074 = vmatpush.msra.mxu0 0.0
        %1075 = vmatpush.msra.mxu0 0.0
        %1076 = vmatpush.msra.mxu0 %v844
        %1077 = vmatmul.f32.gmra.mxu0 %v1059
        %v1078 = vpop.f32.mrf.mxu0
        %v1079 = vadd.f32 0.0, %v1078
        %1080 = vdwg.mxu0
        %v1082 = vsel %vm847, %v1011, 0
        %1084 = vmatpush.msra.mxu0 0.0
        %1085 = vmatpush.msra.mxu0 0.0
        %1086 = vmatpush.msra.mxu0 0.0
        %1087 = vmatpush.msra.mxu0 0.0
        %1088 = vmatpush.msra.mxu0 0.0
        %1089 = vmatpush.msra.mxu0 0.0
        %1090 = vmatpush.msra.mxu0 0.0
        %1091 = vmatpush.msra.mxu0 0.0
        %1092 = vmatpush.msra.mxu0 0.0
        %1093 = vmatpush.msra.mxu0 0.0
        %1094 = vmatpush.msra.mxu0 0.0
        %1095 = vmatpush.msra.mxu0 0.0
        %1096 = vmatpush.msra.mxu0 0.0
        %1097 = vmatpush.msra.mxu0 0.0
        %1098 = vmatpush.msra.mxu0 0.0
        %1099 = vmatpush.msra.mxu0 %v846
        %1100 = vmatmul.f32.gmra.mxu0 %v1082
        %v1101 = vpop.f32.mrf.mxu0
        %v1102 = vadd.f32 0.0, %v1101
        %1103 = vdwg.mxu0
        %v1104 = vrot.slane %v1079, 4
        %v1105 = vsel %vm513, %v1104, %v1033
        %v1106 = vrot.slane %v1033, 4
        %v1107 = vsel %vm513, %v1079, %v1106
        %v1109 = vunpack.c.l.s4 1983009808
        %v1110 = vunpack.c.0.s8 %v1109
        %v1111 = vperm.slane %v1105, %v1110
        %v1113 = vunpack.c.l.s4 1983009808
        %v1114 = vunpack.c.0.s8 %v1113
        %v1115 = vperm.slane %v1107, %v1114
        %v1116 = vrot.slane %v1102, 4
        %v1117 = vsel %vm513, %v1116, %v1056
        %v1118 = vrot.slane %v1056, 4
        %v1119 = vsel %vm513, %v1102, %v1118
        %v1121 = vunpack.c.l.s4 1983009808
        %v1122 = vunpack.c.0.s8 %v1121
        %v1123 = vperm.slane %v1117, %v1122
        %v1125 = vunpack.c.l.s4 1983009808
        %v1126 = vunpack.c.0.s8 %v1125
        %v1127 = vperm.slane %v1119, %v1126
        %v1128 = vrot.slane %v1123, 4
        %v1129 = vsel %vm513, %v1128, %v1111
        %v1130 = vrot.slane %v1111, 4
        %v1131 = vsel %vm513, %v1123, %v1130
        %v1133 = vunpack.c.l.s4 1934713408
        %v1134 = vunpack.c.0.s8 %v1133
        %v1135 = vperm.slane %v1129, %v1134
        %v1137 = vunpack.c.l.s4 1934713408
        %v1138 = vunpack.c.0.s8 %v1137
        %v1139 = vperm.slane %v1131, %v1138
        %v1140 = vrot.slane %v1127, 4
        %v1141 = vsel %vm513, %v1140, %v1115
        %v1142 = vrot.slane %v1115, 4
        %v1143 = vsel %vm513, %v1127, %v1142
        %v1145 = vunpack.c.l.s4 1934713408
        %v1146 = vunpack.c.0.s8 %v1145
        %v1147 = vperm.slane %v1141, %v1146
        %v1149 = vunpack.c.l.s4 1934713408
        %v1150 = vunpack.c.0.s8 %v1149
        %v1151 = vperm.slane %v1143, %v1150
        %v1152 = vrot.slane %v1135, 4
        %v1153 = vsel %vm513, 0.0, %v1152
        %v1154 = vrot.slane %v1139, 4
        %v1155 = vsel %vm513, 0.0, %v1154
        %v1156 = vrot.slane %v1147, 4
        %v1157 = vsel %vm513, 0.0, %v1156
        %v1158 = vrot.slane %v1151, 4
        %v1159 = vsel %vm513, 0.0, %v1158
        %v1160 = vsel %vm513, %v1154, %v1135
        %v1162 = vunpack.c.l.s4 1983009808
        %v1163 = vunpack.c.0.s8 %v1162
        %v1164 = vperm.slane %v1160, %v1163
        %v1165 = vrot.slane %v1155, 4
        %v1166 = vsel %vm513, %v1165, %v1153
        %v1168 = vunpack.c.l.s4 1983009808
        %v1169 = vunpack.c.0.s8 %v1168
        %v1170 = vperm.slane %v1166, %v1169
        %v1171 = vsel %vm513, %v1158, %v1147
        %v1173 = vunpack.c.l.s4 1983009808
        %v1174 = vunpack.c.0.s8 %v1173
        %v1175 = vperm.slane %v1171, %v1174
        %v1176 = vrot.slane %v1159, 4
        %v1177 = vsel %vm513, %v1176, %v1157
        %v1179 = vunpack.c.l.s4 1983009808
        %v1180 = vunpack.c.0.s8 %v1179
        %v1181 = vperm.slane %v1177, %v1180
        %v1182 = vrot.slane %v1170, 4
        %v1183 = vsel %vm513, %v1182, %v1164
        %v1184 = vrot.slane %v1164, 4
        %v1185 = vsel %vm513, %v1170, %v1184
        %v1187 = vunpack.c.l.s4 1934713408
        %v1188 = vunpack.c.0.s8 %v1187
        %v1189 = vperm.slane %v1183, %v1188
        %v1191 = vunpack.c.l.s4 1934713408
        %v1192 = vunpack.c.0.s8 %v1191
        %v1193 = vperm.slane %v1185, %v1192
        %v1194 = vrot.slane %v1181, 4
        %v1195 = vsel %vm513, %v1194, %v1175
        %v1196 = vrot.slane %v1175, 4
        %v1197 = vsel %vm513, %v1181, %v1196
        %v1199 = vunpack.c.l.s4 1934713408
        %v1200 = vunpack.c.0.s8 %v1199
        %v1201 = vperm.slane %v1195, %v1200
        %v1203 = vunpack.c.l.s4 1934713408
        %v1204 = vunpack.c.0.s8 %v1203
        %v1205 = vperm.slane %v1197, %v1204
        %v1206 = vrot.slane %v1201, 4
        %v1207 = vsel %vm513, %v1206, %v1189
        %v1208 = vrot.slane %v1189, 4
        %v1209 = vsel %vm513, %v1201, %v1208
        %v1210 = vrot.slane %v1205, 4
        %v1211 = vsel %vm513, %v1210, %v1193
        %v1212 = vrot.slane %v1193, 4
        %v1213 = vsel %vm513, %v1205, %v1212
        %1215 = vrot.lane.b32.xlu0 %v1209, 8
        %v1216 = vpop.permute.xlu0 %1215
        %1219 = vrot.lane.b32.xlu0 %v1211, 16
        %v1220 = vpop.permute.xlu0 %1219
        %1223 = vrot.lane.b32.xlu0 %v1213, 24
        %v1224 = vpop.permute.xlu0 %1223
        %v1226 = vsel %vm847, %v1207, %v1216
        %vm1227 = vcmask 130048
        %v1228 = vsel %vm1227, %v1226, %v1220
        %vm1229 = vcmask 195584
        %v1230 = vsel %vm1229, %v1228, %v1224
        %v1231 = vld [vmem:[%s437] sm:$0x3f]
        %v1232 = vld [vmem:[%s417] sm:$0xff]
        %v1233 = vld [vmem:[%s417 + $0x8] sm:$0xff]
        %v1234 = vld [vmem:[%s417 + $0x10] sm:$0xff]
        %v1235 = vld [vmem:[%s417 + $0x18] sm:$0xff]
        %v1236 = vperm.slane %v1231, 0
        %v1238 = vsel %vm454, %v1230, 0
        %1240 = vmatpush.msra.mxu0 0.0
        %1241 = vmatpush.msra.mxu0 0.0
        %1242 = vmatpush.msra.mxu0 0.0
        %1243 = vmatpush.msra.mxu0 0.0
        %1244 = vmatpush.msra.mxu0 0.0
        %1245 = vmatpush.msra.mxu0 0.0
        %1246 = vmatpush.msra.mxu0 0.0
        %1247 = vmatpush.msra.mxu0 0.0
        %1248 = vmatpush.msra.mxu0 0.0
        %1249 = vmatpush.msra.mxu0 0.0
        %1250 = vmatpush.msra.mxu0 0.0
        %1251 = vmatpush.msra.mxu0 0.0
        %1252 = vmatpush.msra.mxu0 %v1235
        %1253 = vmatpush.msra.mxu0 %v1234
        %1254 = vmatpush.msra.mxu0 %v1233
        %1255 = vmatpush.msra.mxu0 %v1232
        %1256 = vmatmul.f32.gmra.mxu0 %v1238
        %v1257 = vpop.f32.mrf.mxu0
        %v1258 = vadd.f32 %v1236, %v1257
        %1259 = vdwg.mxu0
        %v1260 = vadd.f32 %v445, %v1258
        %v1261 = vsel %vm454, %v1260, 0.0
        %1262 = vadd.xlane.f32.xlu0 %v1261
        %v1263 = vpop.xlane.xlu0 %1262
        %v1264 = vrcp.pop 32.0
        %v1265 = vmul.f32 32.0, %v1264
        %v1266 = vsub.f32 1.0, %v1265
        %v1267 = vmul.f32 %v1264, %v1266
        %v1268 = vadd.f32 %v1264, %v1267
        %vm1269 = vweird.f32 %v1264
        %v1270 = vsel %vm1269, %v1264, %v1268
        %v1271 = vmul.f32 %v1263, %v1270
        %v1272 = vsub.f32 %v1260, %v1271
        %v1273 = vmul.f32 %v1272, %v1272
        %v1274 = vsel %vm454, %v1273, 0.0
        %1275 = vadd.xlane.f32.xlu0 %v1274
        %v1276 = vpop.xlane.xlu0 %1275
        %v1277 = vmul.f32 %v1276, %v1270
        %v1278 = vadd.f32 %v1277, 1e-06
        %v1279 = vrsqrt.pop %v1278
        %v1280 = vmul.f32 %v1279, %v1278
        %v1281 = vmul.f32 %v1280, %v1279
        %v1282 = vmul.f32 0.5, %v1281
        %v1283 = vsub.f32 1.5, %v1282
        %v1284 = vmul.f32 %v1279, %v1283
        %vm1285 = vweird.f32 %v1278
        %vm1286 = vweird.f32 %v1279
        %vm1287 = vmor %vm1285, %vm1286
        %v1288 = vsel %vm1287, %v1279, %v1284
        %v1289 = vmul.f32 %v1272, %v1288
        %v1290 = vperm.slane %v1231, 1
        %v1291 = vmul.f32 %v1289, %v1290
        %v1292 = vperm.slane %v1231, 2
        %v1293 = vadd.f32 %v1291, %v1292
        %v1294 = vld [vmem:[%s422] sm:$0xff]
        %v1295 = vld [vmem:[%s422 + $0x8] sm:$0xff]
        %v1296 = vld [vmem:[%s422 + $0x10] sm:$0xff]
        %v1297 = vld [vmem:[%s422 + $0x18] sm:$0xff]
        %v1298 = vld [vmem:[%s433] sm:$0x1]
        %v1300 = vperm.slane %v1298, 0
        %v1303 = vsel %vm454, %v1293, 0
        %1305 = vmatpush.msra.mxu0 0.0
        %1306 = vmatpush.msra.mxu0 0.0
        %1307 = vmatpush.msra.mxu0 0.0
        %1308 = vmatpush.msra.mxu0 0.0
        %1309 = vmatpush.msra.mxu0 0.0
        %1310 = vmatpush.msra.mxu0 0.0
        %1311 = vmatpush.msra.mxu0 0.0
        %1312 = vmatpush.msra.mxu0 0.0
        %1313 = vmatpush.msra.mxu0 0.0
        %1314 = vmatpush.msra.mxu0 0.0
        %1315 = vmatpush.msra.mxu0 0.0
        %1316 = vmatpush.msra.mxu0 0.0
        %1317 = vmatpush.msra.mxu0 %v1297
        %1318 = vmatpush.msra.mxu0 %v1296
        %1319 = vmatpush.msra.mxu0 %v1295
        %1320 = vmatpush.msra.mxu0 %v1294
        %1321 = vmatmul.f32.gmra.mxu0 %v1303
        %v1322 = vpop.f32.mrf.mxu0
        %v1323 = vadd.f32 %v1300, %v1322
        %1324 = vdwg.mxu0
        %v1325 = vmax.f32 %v1323, 0.0
        %v1326 = vld [vmem:[%s427] sm:$0xff]
        %v1327 = vld [vmem:[%s427 + $0x8] sm:$0xff]
        %v1328 = vld [vmem:[%s427 + $0x10] sm:$0xff]
        %v1329 = vld [vmem:[%s427 + $0x18] sm:$0xff]
        %v1330 = vld [vmem:[%s427 + $0x20] sm:$0xff]
        %v1331 = vld [vmem:[%s427 + $0x28] sm:$0xff]
        %v1332 = vld [vmem:[%s427 + $0x30] sm:$0xff]
        %v1333 = vld [vmem:[%s427 + $0x38] sm:$0xff]
        %v1334 = vperm.slane %v1231, 3
        %vm1335 = vcmask 523264
        %v1337 = vsel %vm1335, %v1325, 0
        %1339 = vmatpush.msra.mxu0 0.0
        %1340 = vmatpush.msra.mxu0 0.0
        %1341 = vmatpush.msra.mxu0 0.0
        %1342 = vmatpush.msra.mxu0 0.0
        %1343 = vmatpush.msra.mxu0 0.0
        %1344 = vmatpush.msra.mxu0 0.0
        %1345 = vmatpush.msra.mxu0 0.0
        %1346 = vmatpush.msra.mxu0 0.0
        %1347 = vmatpush.msra.mxu0 %v1333
        %1348 = vmatpush.msra.mxu0 %v1332
        %1349 = vmatpush.msra.mxu0 %v1331
        %1350 = vmatpush.msra.mxu0 %v1330
        %1351 = vmatpush.msra.mxu0 %v1329
        %1352 = vmatpush.msra.mxu0 %v1328
        %1353 = vmatpush.msra.mxu0 %v1327
        %1354 = vmatpush.msra.mxu0 %v1326
        %1355 = vmatmul.f32.gmra.mxu0 %v1337
        %v1356 = vpop.f32.mrf.mxu0
        %v1357 = vadd.f32 %v1334, %v1356
        %1358 = vdwg.mxu0
        %v1359 = vadd.f32 %v1293, %v1357
        %v1360 = vsel %vm454, %v1359, 0.0
        %1361 = vadd.xlane.f32.xlu0 %v1360
        %v1362 = vpop.xlane.xlu0 %1361
        %v1363 = vmul.f32 %v1362, %v1270
        %v1364 = vsub.f32 %v1359, %v1363
        %v1365 = vmul.f32 %v1364, %v1364
        %v1366 = vsel %vm454, %v1365, 0.0
        %1367 = vadd.xlane.f32.xlu0 %v1366
        %v1368 = vpop.xlane.xlu0 %1367
        %v1369 = vmul.f32 %v1368, %v1270
        %v1370 = vadd.f32 %v1369, 1e-06
        %v1371 = vrsqrt.pop %v1370
        %v1372 = vmul.f32 %v1371, %v1370
        %v1373 = vmul.f32 %v1372, %v1371
        %v1374 = vmul.f32 0.5, %v1373
        %v1375 = vsub.f32 1.5, %v1374
        %v1376 = vmul.f32 %v1371, %v1375
        %vm1377 = vweird.f32 %v1370
        %vm1378 = vweird.f32 %v1371
        %vm1379 = vmor %vm1377, %vm1378
        %v1380 = vsel %vm1379, %v1371, %v1376
        %v1381 = vmul.f32 %v1364, %v1380
        %v1382 = vperm.slane %v1231, 4
        %v1383 = vmul.f32 %v1381, %v1382
        %v1384 = vperm.slane %v1231, 5
        %v1385 = vadd.f32 %v1383, %v1384
        %1386 = vst.msk [vmem:[#allocation2] sm:$0xff] %vm454, %v1385
        %p1387 = scmp.eq.s32.totalorder %s27, 1
        // Predicated region
        $region57: #{tpu_custom_call.1} parent=51 // pred_check
          %p1388 = pneg %p1387
        $region58: #{tpu_custom_call.1} parent=51 // pred_check_branch
          %1390 = sbr.rel (%p1388) target = $region60
        $region59: #{tpu_custom_call.1} parent=51 // pred_region
          %1391 = vst.msk [vmem:[%s403] sm:$0xff] %vm454, %v1385
        $region60: #{tpu_custom_call.1} parent=51 // pred_fallthru
          _
        %s1392 = sand.u32 %s250, 1
        %s1393 = scalar_lea.sflag [#allocation4], %s1392
        %s1394 = sand.u32 %s250, 1
        %s1395 = smul.addr %s1394, 8
        %s1396 = scalar_lea.vmem [#allocation3], %s1395
        // Predicated region
        $region61: #{tpu_custom_call.1} parent=51 // pred_check
          %p1397 = pneg %p260
        $region62: #{tpu_custom_call.1} parent=51 // pred_check_branch
          %1399 = sbr.rel (%p1397) target = $region64
        $region63: #{tpu_custom_call.1} parent=51 // pred_region
          %1401 = vsyncadd %s1393, 0
          %s1402 = smul.addr %s26, 8
          %s1403 = scalar_lea.hbm %s8, %s1402
          %s1405 = sshll.u32 %s1396, 4
          %s1406 = int_to_ptr.vmem [resolvable:$true] %s1405
          %s1407 = sshll.u32 %s1403, 4
          %s1408 = int_to_ptr.hbm [resolvable:$true] %s1407
          %1410 = dma.vmem_to_hbm [thread:$0]  %s1406, 128, %s1408, %s1393
        $region64: #{tpu_custom_call.1} parent=51 // pred_fallthru
          _
      $region52: #{tpu_custom_call.1} parent=5 // pred_fallthru
        _
      %p1411 = scmp.le.s32.totalorder 2, %s17
      // Predicated region
      $region65: #{tpu_custom_call.1} parent=5 // pred_check
        %p1412 = pneg %p1411
      $region66: #{tpu_custom_call.1} parent=5 // pred_check_branch
        %1414 = sbr.rel (%p1412) target = $region68
      $region67: #{tpu_custom_call.1} parent=5 // pred_region
        %s1415 = ssub.s32 %s17, 2
        // Predicated region
        $region69: #{tpu_custom_call.1} parent=67 // pred_check
          %p1416 = pneg %p266
        $region70: #{tpu_custom_call.1} parent=67 // pred_check_branch
          %1418 = sbr.rel (%p1416) target = $region72
        $region71: #{tpu_custom_call.1} parent=67 // pred_region
          %s1419 = sand.u32 %s251, 1
          %s1420 = scalar_lea.sflag [#allocation4], %s1419
          %s1421 = sand.u32 %s251, 1
          %s1422 = smul.addr %s1421, 8
          %s1423 = scalar_lea.vmem [#allocation3], %s1422
          %1425 = dma.done %s1420, 128
        $region72: #{tpu_custom_call.1} parent=67 // pred_fallthru
          _
      $region68: #{tpu_custom_call.1} parent=5 // pred_fallthru
        _
    $region6: #{tpu_custom_call.1} parent=1 // loop_footer
      %s21 = sadd.s32 1, %s17
    $region7: #{tpu_custom_call.1} parent=1 // loop_footer_branch
      %16 = sbr.rel target = $region3
    $region8: #{tpu_custom_call.1} parent=1 // loop_exit
      _
    %1426 = vsyncpa [#allocation4], 1
    %s1427 = scalar_lea.sflag [#allocation4], 1
    %1428 = vsyncpa %s1427, 1

</llo_original>
